<compile_context>
chip_gen: v5e
topology: v5e:2x2
jax: 0.10.0
libtpu: 0.0.40
codegen_flags: <defaults>
</compile_context>

<pallas_src>
import functools

import jax
import jax.numpy as jnp
from jax.experimental import pallas as pl
from jax.experimental.pallas import tpu as pltpu


def attention_kernel(x_ref, wqkv_ref, bqkv_ref, wproj_ref, bproj_ref, o_ref,
                     *, num_heads, head_dim, n_valid):
    # x_ref:     (1, Np, C)     one (padded) batch element
    # wqkv_ref:  (C, 3*AHD)     pre-transposed QKV weight (q columns pre-scaled)
    # bqkv_ref:  (1, 3*AHD)     [q_bias*scale, 0, v_bias] (or zeros)
    # wproj_ref: (AHD, C)       pre-transposed proj weight
    # bproj_ref: (1, C)
    # o_ref:     (1, Np, C)
    x = x_ref[0]                                   # (Np, C)
    n_pad = x.shape[0]
    ahd = num_heads * head_dim

    # Fused QKV projection: x @ Wqkv + b  (weights already transposed/scaled).
    qkv = jnp.dot(x, wqkv_ref[...],
                  preferred_element_type=jnp.float32) + bqkv_ref[...]   # (Np, 3*AHD)

    q_all = qkv[:, 0 * ahd:1 * ahd]
    k_all = qkv[:, 1 * ahd:2 * ahd]
    v_all = qkv[:, 2 * ahd:3 * ahd]

    # Static mask for padded key columns (n_valid / n_pad known at trace time).
    if n_valid < n_pad:
        key_valid = jax.lax.broadcasted_iota(jnp.int32, (1, n_pad), 1) < n_valid
    else:
        key_valid = None

    # Heads are unrolled statically (num_heads is small); the head concat is
    # folded into the output projection by accumulating per-head contributions.
    acc = None
    for h in range(num_heads):
        lo, hi = h * head_dim, (h + 1) * head_dim
        q = q_all[:, lo:hi]                        # (Np, hd)  (scale pre-folded)
        k = k_all[:, lo:hi]                        # (Np, hd)
        v = v_all[:, lo:hi]                        # (Np, hd)

        # S = Q K^T as a contraction over the feature dim (no explicit k.T).
        s = jax.lax.dot_general(q, k, (((1,), (1,)), ((), ())),
                                preferred_element_type=jnp.float32)     # (Np, Np)
        if key_valid is not None:
            s = jnp.where(key_valid, s, -1e30)
        s = s - jnp.max(s, axis=-1, keepdims=True)                      # stable softmax
        p = jnp.exp(s)
        denom = jnp.sum(p, axis=-1, keepdims=True)
        p = p * pl.reciprocal(denom, approx=True)  # divide on EUP, not VALU

        ctx = jnp.dot(p, v, preferred_element_type=jnp.float32)         # (Np, hd)
        contrib = jnp.dot(ctx, wproj_ref[lo:hi, :],
                          preferred_element_type=jnp.float32)           # (Np, C)
        acc = contrib if acc is None else acc + contrib

    out = acc + bproj_ref[...]                     # (Np, C)
    o_ref[0] = out.astype(o_ref.dtype)


def attention_pallas(x, wqkv, q_bias, v_bias, wproj, bproj, *, num_heads, scale):
    B, N, C = x.shape
    ahd3 = wqkv.shape[0]
    ahd = ahd3 // 3
    head_dim = ahd // num_heads

    # QKV bias in F.linear layout: [q_bias, 0, v_bias]; fold the softmax scale
    # into the q part (reference applies q = (x @ Wq + bq) * scale).
    if q_bias is not None:
        qkv_bias = jnp.concatenate(
            [q_bias * scale, jnp.zeros_like(v_bias), v_bias])
    else:
        qkv_bias = jnp.zeros((ahd3,), x.dtype)
    qkv_bias = qkv_bias.reshape(1, ahd3)

    # One-time weight transposes (XLA side) + fold scale into q columns.
    col_scale = jnp.concatenate([jnp.full((ahd,), scale, wqkv.dtype),
                                 jnp.ones((2 * ahd,), wqkv.dtype)])
    wqkv_t = wqkv.T * col_scale[None, :]           # (C, 3*AHD)
    wproj_t = wproj.T                              # (AHD, C)
    bproj2 = bproj.reshape(1, C)

    # Pad the sequence to a multiple of 128 for lane-dense score/output tiles.
    n_pad = ((N + 127) // 128) * 128
    x_in = jnp.pad(x, ((0, 0), (0, n_pad - N), (0, 0))) if n_pad != N else x

    kernel = functools.partial(attention_kernel,
                               num_heads=num_heads,
                               head_dim=head_dim,
                               n_valid=N)

    out = pl.pallas_call(
        kernel,
        out_shape=jax.ShapeDtypeStruct((B, n_pad, C), x.dtype),
        grid_spec=pltpu.PrefetchScalarGridSpec(
            num_scalar_prefetch=0,
            grid=(B,),
            in_specs=[
                pl.BlockSpec((1, n_pad, C), lambda b: (b, 0, 0)),   # x[b]
                pl.BlockSpec((C, ahd3), lambda b: (0, 0)),          # qkv weight^T
                pl.BlockSpec((1, ahd3), lambda b: (0, 0)),          # qkv bias
                pl.BlockSpec((ahd, C), lambda b: (0, 0)),           # proj weight^T
                pl.BlockSpec((1, C), lambda b: (0, 0)),             # proj bias
            ],
            out_specs=pl.BlockSpec((1, n_pad, C), lambda b: (b, 0, 0)),
        ),
        compiler_params=pltpu.CompilerParams(
            dimension_semantics=("parallel",),
            vmem_limit_bytes=48 * 1024 * 1024),
    )(x_in, wqkv_t, qkv_bias, wproj_t, bproj2)

    return out[:, :N, :] if n_pad != N else out


def attention_reference(x, wqkv, q_bias, v_bias, wproj, bproj, *, num_heads, scale):
    """Pure-JAX mirror of the PyTorch forward (for verification)."""
    B, N, C = x.shape
    ahd3 = wqkv.shape[0]
    ahd = ahd3 // 3
    head_dim = ahd // num_heads
    if q_bias is not None:
        qkv_bias = jnp.concatenate([q_bias, jnp.zeros_like(v_bias), v_bias])
    else:
        qkv_bias = jnp.zeros((ahd3,), x.dtype)
    qkv = x @ wqkv.T + qkv_bias
    qkv = qkv.reshape(B, N, 3, num_heads, head_dim).transpose(2, 0, 3, 1, 4)
    q, k, v = qkv[0], qkv[1], qkv[2]
    q = q * scale
    attn = jnp.einsum('bhnd,bhmd->bhnm', q, k)
    attn = jax.nn.softmax(attn, axis=-1)
    out = jnp.einsum('bhnm,bhmd->bhnd', attn, v)
    out = out.transpose(0, 2, 1, 3).reshape(B, N, ahd)
    return out @ wproj.T + bproj


if __name__ == "__main__":
    # Small shapes consistent with the module: dim must be divisible by num_heads.
    B, N, C = 2, 8, 32
    num_heads = 4
    head_dim = C // num_heads
    all_head_dim = head_dim * num_heads
    scale = head_dim ** (-0.5)

    key = jax.random.PRNGKey(0)
    kx, kw1, kqb, kvb, kw2, kb2 = jax.random.split(key, 6)

    x = jax.random.normal(kx, (B, N, C), dtype=jnp.float32)
    wqkv = 0.05 * jax.random.normal(kw1, (3 * all_head_dim, C), dtype=jnp.float32)
    q_bias = 0.05 * jax.random.normal(kqb, (all_head_dim,), dtype=jnp.float32)
    v_bias = 0.05 * jax.random.normal(kvb, (all_head_dim,), dtype=jnp.float32)
    wproj = 0.05 * jax.random.normal(kw2, (C, all_head_dim), dtype=jnp.float32)
    bproj = 0.05 * jax.random.normal(kb2, (C,), dtype=jnp.float32)

    out = attention_pallas(x, wqkv, q_bias, v_bias, wproj, bproj,
                           num_heads=num_heads, scale=scale)
    out = jax.block_until_ready(out)

    ref = attention_reference(x, wqkv, q_bias, v_bias, wproj, bproj,
                              num_heads=num_heads, scale=scale)
    assert out.shape == (B, N, C)
    # Slightly relaxed tolerance: approx EUP reciprocal in the softmax denom.
    assert jnp.allclose(out, ref, atol=2e-3, rtol=2e-3), "mismatch vs JAX reference"

    print("KERNEL_OK")
</pallas_src>

<mosaic_0001>
module attributes {stable_mosaic.version = 11 : i64} {
  func.func @attention_kernel(%arg0: i32, %arg1: memref<1x128x32xf32, #tpu.memory_space<vmem>>, %arg2: memref<32x96xf32, #tpu.memory_space<vmem>>, %arg3: memref<1x96xf32, #tpu.memory_space<vmem>>, %arg4: memref<32x32xf32, #tpu.memory_space<vmem>>, %arg5: memref<1x32xf32, #tpu.memory_space<vmem>>, %arg6: memref<1x128x32xf32, #tpu.memory_space<vmem>>) attributes {dimension_semantics = [#tpu.dimension_semantics<parallel>], iteration_bounds = array<i64: 2>, scalar_prefetch = 0 : i64, scratch_operands = 0 : i64, tpu.core_type = #tpu.core_type<tc>, window_params = [{transform_indices = @transform_0, window_bounds = array<i64: 1, 128, 32>}, {pipeline_mode = #tpu.pipeline_mode<synchronous>, transform_indices = @transform_1, window_bounds = array<i64: 32, 96>}, {pipeline_mode = #tpu.pipeline_mode<synchronous>, transform_indices = @transform_2, window_bounds = array<i64: 1, 96>}, {pipeline_mode = #tpu.pipeline_mode<synchronous>, transform_indices = @transform_3, window_bounds = array<i64: 32, 32>}, {pipeline_mode = #tpu.pipeline_mode<synchronous>, transform_indices = @transform_4, window_bounds = array<i64: 1, 32>}, {transform_indices = @transform_5, window_bounds = array<i64: 1, 128, 32>}]} {
    %c0 = arith.constant 0 : index
    %c0_0 = arith.constant 0 : index
    %c0_1 = arith.constant 0 : index
    %0 = vector.load %arg1[%c0, %c0_0, %c0_1] : memref<1x128x32xf32, #tpu.memory_space<vmem>>, vector<1x128x32xf32>
    %1 = vector.shape_cast %0 : vector<1x128x32xf32> to vector<128x32xf32>
    %c0_2 = arith.constant 0 : index
    %c0_3 = arith.constant 0 : index
    %2 = vector.load %arg2[%c0_2, %c0_3] : memref<32x96xf32, #tpu.memory_space<vmem>>, vector<32x96xf32>
    %cst = arith.constant dense<0.000000e+00> : vector<128x96xf32>
    %3 = tpu.matmul %1, %2, %cst {dimension_numbers = #tpu.dot_dimension_numbers<[1], [0], [0], [1], [0, 0, 1, 1], [], []>} : vector<128x32xf32>, vector<32x96xf32>, vector<128x96xf32> -> vector<128x96xf32>
    %c0_4 = arith.constant 0 : index
    %c0_5 = arith.constant 0 : index
    %4 = vector.load %arg3[%c0_4, %c0_5] : memref<1x96xf32, #tpu.memory_space<vmem>>, vector<1x96xf32>
    %5 = vector.broadcast %4 : vector<1x96xf32> to vector<128x96xf32>
    %6 = arith.addf %3, %5 : vector<128x96xf32>
    %7 = vector.extract_strided_slice %6 {offsets = [0, 0], sizes = [128, 32], strides = [1, 1]} : vector<128x96xf32> to vector<128x32xf32>
    %8 = vector.extract_strided_slice %6 {offsets = [0, 32], sizes = [128, 32], strides = [1, 1]} : vector<128x96xf32> to vector<128x32xf32>
    %9 = vector.extract_strided_slice %6 {offsets = [0, 64], sizes = [128, 32], strides = [1, 1]} : vector<128x96xf32> to vector<128x32xf32>
    %10 = tpu.iota {dimensions = array<i32: 1>} : vector<1x128xi32>
    %c8_i32 = arith.constant 8 : i32
    %11 = vector.broadcast %c8_i32 : i32 to vector<1x128xi32>
    %12 = arith.cmpi slt, %10, %11 : vector<1x128xi32>
    %13 = vector.extract_strided_slice %7 {offsets = [0, 0], sizes = [128, 8], strides = [1, 1]} : vector<128x32xf32> to vector<128x8xf32>
    %14 = vector.extract_strided_slice %8 {offsets = [0, 0], sizes = [128, 8], strides = [1, 1]} : vector<128x32xf32> to vector<128x8xf32>
    %15 = vector.extract_strided_slice %9 {offsets = [0, 0], sizes = [128, 8], strides = [1, 1]} : vector<128x32xf32> to vector<128x8xf32>
    %cst_6 = arith.constant dense<0.000000e+00> : vector<128x128xf32>
    %16 = tpu.matmul %13, %14, %cst_6 {dimension_numbers = #tpu.dot_dimension_numbers<[1], [1], [0], [0], [0, 0, 1, 0], [], []>} : vector<128x8xf32>, vector<128x8xf32>, vector<128x128xf32> -> vector<128x128xf32>
    %cst_7 = arith.constant -1.000000e+30 : f32
    %17 = vector.shape_cast %12 : vector<1x128xi1> to vector<1x128xi1>
    %18 = vector.broadcast %17 : vector<1x128xi1> to vector<128x128xi1>
    %19 = vector.broadcast %cst_7 : f32 to vector<128x128xf32>
    %20 = arith.select %18, %16, %19 : vector<128x128xi1>, vector<128x128xf32>
    %cst_8 = arith.constant dense<0xFF800000> : vector<128xf32>
    %21 = vector.multi_reduction <maximumf>, %20, %cst_8 [1] : vector<128x128xf32> to vector<128xf32>
    %22 = vector.shape_cast %21 : vector<128xf32> to vector<128x1xf32>
    %23 = vector.broadcast %22 : vector<128x1xf32> to vector<128x128xf32>
    %24 = arith.subf %20, %23 : vector<128x128xf32>
    %25 = math.exp %24 : vector<128x128xf32>
    %cst_9 = arith.constant dense<0.000000e+00> : vector<128xf32>
    %26 = vector.multi_reduction <add>, %25, %cst_9 [1] : vector<128x128xf32> to vector<128xf32>
    %27 = vector.shape_cast %26 : vector<128xf32> to vector<128x1xf32>
    %28 = tpu.reciprocal %27 {approx = true} : vector<128x1xf32> -> vector<128x1xf32>
    %29 = vector.broadcast %28 : vector<128x1xf32> to vector<128x128xf32>
    %30 = arith.mulf %25, %29 : vector<128x128xf32>
    %cst_10 = arith.constant dense<0.000000e+00> : vector<128x8xf32>
    %31 = tpu.matmul %30, %15, %cst_10 {dimension_numbers = #tpu.dot_dimension_numbers<[1], [0], [0], [1], [0, 0, 1, 1], [], []>} : vector<128x128xf32>, vector<128x8xf32>, vector<128x8xf32> -> vector<128x8xf32>
    %c0_11 = arith.constant 0 : index
    %c0_12 = arith.constant 0 : index
    %32 = vector.load %arg4[%c0_11, %c0_12] : memref<32x32xf32, #tpu.memory_space<vmem>>, vector<8x32xf32>
    %cst_13 = arith.constant dense<0.000000e+00> : vector<128x32xf32>
    %33 = tpu.matmul %31, %32, %cst_13 {dimension_numbers = #tpu.dot_dimension_numbers<[1], [0], [0], [1], [0, 0, 1, 1], [], []>} : vector<128x8xf32>, vector<8x32xf32>, vector<128x32xf32> -> vector<128x32xf32>
    %34 = vector.extract_strided_slice %7 {offsets = [0, 8], sizes = [128, 8], strides = [1, 1]} : vector<128x32xf32> to vector<128x8xf32>
    %35 = vector.extract_strided_slice %8 {offsets = [0, 8], sizes = [128, 8], strides = [1, 1]} : vector<128x32xf32> to vector<128x8xf32>
    %36 = vector.extract_strided_slice %9 {offsets = [0, 8], sizes = [128, 8], strides = [1, 1]} : vector<128x32xf32> to vector<128x8xf32>
    %cst_14 = arith.constant dense<0.000000e+00> : vector<128x128xf32>
    %37 = tpu.matmul %34, %35, %cst_14 {dimension_numbers = #tpu.dot_dimension_numbers<[1], [1], [0], [0], [0, 0, 1, 0], [], []>} : vector<128x8xf32>, vector<128x8xf32>, vector<128x128xf32> -> vector<128x128xf32>
    %cst_15 = arith.constant -1.000000e+30 : f32
    %38 = vector.shape_cast %12 : vector<1x128xi1> to vector<1x128xi1>
    %39 = vector.broadcast %38 : vector<1x128xi1> to vector<128x128xi1>
    %40 = vector.broadcast %cst_15 : f32 to vector<128x128xf32>
    %41 = arith.select %39, %37, %40 : vector<128x128xi1>, vector<128x128xf32>
    %cst_16 = arith.constant dense<0xFF800000> : vector<128xf32>
    %42 = vector.multi_reduction <maximumf>, %41, %cst_16 [1] : vector<128x128xf32> to vector<128xf32>
    %43 = vector.shape_cast %42 : vector<128xf32> to vector<128x1xf32>
    %44 = vector.broadcast %43 : vector<128x1xf32> to vector<128x128xf32>
    %45 = arith.subf %41, %44 : vector<128x128xf32>
    %46 = math.exp %45 : vector<128x128xf32>
    %cst_17 = arith.constant dense<0.000000e+00> : vector<128xf32>
    %47 = vector.multi_reduction <add>, %46, %cst_17 [1] : vector<128x128xf32> to vector<128xf32>
    %48 = vector.shape_cast %47 : vector<128xf32> to vector<128x1xf32>
    %49 = tpu.reciprocal %48 {approx = true} : vector<128x1xf32> -> vector<128x1xf32>
    %50 = vector.broadcast %49 : vector<128x1xf32> to vector<128x128xf32>
    %51 = arith.mulf %46, %50 : vector<128x128xf32>
    %cst_18 = arith.constant dense<0.000000e+00> : vector<128x8xf32>
    %52 = tpu.matmul %51, %36, %cst_18 {dimension_numbers = #tpu.dot_dimension_numbers<[1], [0], [0], [1], [0, 0, 1, 1], [], []>} : vector<128x128xf32>, vector<128x8xf32>, vector<128x8xf32> -> vector<128x8xf32>
    %c8 = arith.constant 8 : index
    %c0_19 = arith.constant 0 : index
    %53 = vector.load %arg4[%c8, %c0_19] : memref<32x32xf32, #tpu.memory_space<vmem>>, vector<8x32xf32>
    %cst_20 = arith.constant dense<0.000000e+00> : vector<128x32xf32>
    %54 = tpu.matmul %52, %53, %cst_20 {dimension_numbers = #tpu.dot_dimension_numbers<[1], [0], [0], [1], [0, 0, 1, 1], [], []>} : vector<128x8xf32>, vector<8x32xf32>, vector<128x32xf32> -> vector<128x32xf32>
    %55 = arith.addf %33, %54 : vector<128x32xf32>
    %56 = vector.extract_strided_slice %7 {offsets = [0, 16], sizes = [128, 8], strides = [1, 1]} : vector<128x32xf32> to vector<128x8xf32>
    %57 = vector.extract_strided_slice %8 {offsets = [0, 16], sizes = [128, 8], strides = [1, 1]} : vector<128x32xf32> to vector<128x8xf32>
    %58 = vector.extract_strided_slice %9 {offsets = [0, 16], sizes = [128, 8], strides = [1, 1]} : vector<128x32xf32> to vector<128x8xf32>
    %cst_21 = arith.constant dense<0.000000e+00> : vector<128x128xf32>
    %59 = tpu.matmul %56, %57, %cst_21 {dimension_numbers = #tpu.dot_dimension_numbers<[1], [1], [0], [0], [0, 0, 1, 0], [], []>} : vector<128x8xf32>, vector<128x8xf32>, vector<128x128xf32> -> vector<128x128xf32>
    %cst_22 = arith.constant -1.000000e+30 : f32
    %60 = vector.shape_cast %12 : vector<1x128xi1> to vector<1x128xi1>
    %61 = vector.broadcast %60 : vector<1x128xi1> to vector<128x128xi1>
    %62 = vector.broadcast %cst_22 : f32 to vector<128x128xf32>
    %63 = arith.select %61, %59, %62 : vector<128x128xi1>, vector<128x128xf32>
    %cst_23 = arith.constant dense<0xFF800000> : vector<128xf32>
    %64 = vector.multi_reduction <maximumf>, %63, %cst_23 [1] : vector<128x128xf32> to vector<128xf32>
    %65 = vector.shape_cast %64 : vector<128xf32> to vector<128x1xf32>
    %66 = vector.broadcast %65 : vector<128x1xf32> to vector<128x128xf32>
    %67 = arith.subf %63, %66 : vector<128x128xf32>
    %68 = math.exp %67 : vector<128x128xf32>
    %cst_24 = arith.constant dense<0.000000e+00> : vector<128xf32>
    %69 = vector.multi_reduction <add>, %68, %cst_24 [1] : vector<128x128xf32> to vector<128xf32>
    %70 = vector.shape_cast %69 : vector<128xf32> to vector<128x1xf32>
    %71 = tpu.reciprocal %70 {approx = true} : vector<128x1xf32> -> vector<128x1xf32>
    %72 = vector.broadcast %71 : vector<128x1xf32> to vector<128x128xf32>
    %73 = arith.mulf %68, %72 : vector<128x128xf32>
    %cst_25 = arith.constant dense<0.000000e+00> : vector<128x8xf32>
    %74 = tpu.matmul %73, %58, %cst_25 {dimension_numbers = #tpu.dot_dimension_numbers<[1], [0], [0], [1], [0, 0, 1, 1], [], []>} : vector<128x128xf32>, vector<128x8xf32>, vector<128x8xf32> -> vector<128x8xf32>
    %c16 = arith.constant 16 : index
    %c0_26 = arith.constant 0 : index
    %75 = vector.load %arg4[%c16, %c0_26] : memref<32x32xf32, #tpu.memory_space<vmem>>, vector<8x32xf32>
    %cst_27 = arith.constant dense<0.000000e+00> : vector<128x32xf32>
    %76 = tpu.matmul %74, %75, %cst_27 {dimension_numbers = #tpu.dot_dimension_numbers<[1], [0], [0], [1], [0, 0, 1, 1], [], []>} : vector<128x8xf32>, vector<8x32xf32>, vector<128x32xf32> -> vector<128x32xf32>
    %77 = arith.addf %55, %76 : vector<128x32xf32>
    %78 = vector.extract_strided_slice %7 {offsets = [0, 24], sizes = [128, 8], strides = [1, 1]} : vector<128x32xf32> to vector<128x8xf32>
    %79 = vector.extract_strided_slice %8 {offsets = [0, 24], sizes = [128, 8], strides = [1, 1]} : vector<128x32xf32> to vector<128x8xf32>
    %80 = vector.extract_strided_slice %9 {offsets = [0, 24], sizes = [128, 8], strides = [1, 1]} : vector<128x32xf32> to vector<128x8xf32>
    %cst_28 = arith.constant dense<0.000000e+00> : vector<128x128xf32>
    %81 = tpu.matmul %78, %79, %cst_28 {dimension_numbers = #tpu.dot_dimension_numbers<[1], [1], [0], [0], [0, 0, 1, 0], [], []>} : vector<128x8xf32>, vector<128x8xf32>, vector<128x128xf32> -> vector<128x128xf32>
    %cst_29 = arith.constant -1.000000e+30 : f32
    %82 = vector.shape_cast %12 : vector<1x128xi1> to vector<1x128xi1>
    %83 = vector.broadcast %82 : vector<1x128xi1> to vector<128x128xi1>
    %84 = vector.broadcast %cst_29 : f32 to vector<128x128xf32>
    %85 = arith.select %83, %81, %84 : vector<128x128xi1>, vector<128x128xf32>
    %cst_30 = arith.constant dense<0xFF800000> : vector<128xf32>
    %86 = vector.multi_reduction <maximumf>, %85, %cst_30 [1] : vector<128x128xf32> to vector<128xf32>
    %87 = vector.shape_cast %86 : vector<128xf32> to vector<128x1xf32>
    %88 = vector.broadcast %87 : vector<128x1xf32> to vector<128x128xf32>
    %89 = arith.subf %85, %88 : vector<128x128xf32>
    %90 = math.exp %89 : vector<128x128xf32>
    %cst_31 = arith.constant dense<0.000000e+00> : vector<128xf32>
    %91 = vector.multi_reduction <add>, %90, %cst_31 [1] : vector<128x128xf32> to vector<128xf32>
    %92 = vector.shape_cast %91 : vector<128xf32> to vector<128x1xf32>
    %93 = tpu.reciprocal %92 {approx = true} : vector<128x1xf32> -> vector<128x1xf32>
    %94 = vector.broadcast %93 : vector<128x1xf32> to vector<128x128xf32>
    %95 = arith.mulf %90, %94 : vector<128x128xf32>
    %cst_32 = arith.constant dense<0.000000e+00> : vector<128x8xf32>
    %96 = tpu.matmul %95, %80, %cst_32 {dimension_numbers = #tpu.dot_dimension_numbers<[1], [0], [0], [1], [0, 0, 1, 1], [], []>} : vector<128x128xf32>, vector<128x8xf32>, vector<128x8xf32> -> vector<128x8xf32>
    %c24 = arith.constant 24 : index
    %c0_33 = arith.constant 0 : index
    %97 = vector.load %arg4[%c24, %c0_33] : memref<32x32xf32, #tpu.memory_space<vmem>>, vector<8x32xf32>
    %cst_34 = arith.constant dense<0.000000e+00> : vector<128x32xf32>
    %98 = tpu.matmul %96, %97, %cst_34 {dimension_numbers = #tpu.dot_dimension_numbers<[1], [0], [0], [1], [0, 0, 1, 1], [], []>} : vector<128x8xf32>, vector<8x32xf32>, vector<128x32xf32> -> vector<128x32xf32>
    %99 = arith.addf %77, %98 : vector<128x32xf32>
    %c0_35 = arith.constant 0 : index
    %c0_36 = arith.constant 0 : index
    %100 = vector.load %arg5[%c0_35, %c0_36] : memref<1x32xf32, #tpu.memory_space<vmem>>, vector<1x32xf32>
    %101 = vector.broadcast %100 : vector<1x32xf32> to vector<128x32xf32>
    %102 = arith.addf %99, %101 : vector<128x32xf32>
    %c0_37 = arith.constant 0 : index
    %c0_38 = arith.constant 0 : index
    %c0_39 = arith.constant 0 : index
    %103 = vector.load %arg6[%c0_37, %c0_38, %c0_39] : memref<1x128x32xf32, #tpu.memory_space<vmem>>, vector<1x128x32xf32>
    %104 = vector.shape_cast %103 : vector<1x128x32xf32> to vector<128x32xf32>
    %105 = vector.shape_cast %102 : vector<128x32xf32> to vector<1x128x32xf32>
    tpu.vector_store %arg6[%c0_37, %c0_38, %c0_39], %105 {strides = array<i32>} : memref<1x128x32xf32, #tpu.memory_space<vmem>>, vector<1x128x32xf32>,
    return
  }
  func.func @transform_0(%arg0: i32) -> (i32, i32, i32) {
    %c0_i32 = arith.constant 0 : i32
    %c0_i32_0 = arith.constant 0 : i32
    %c0_i32_1 = arith.constant 0 : i32
    return %arg0, %c0_i32, %c0_i32_0 : i32, i32, i32
  }
  func.func @transform_1(%arg0: i32) -> (i32, i32) {
    %c0_i32 = arith.constant 0 : i32
    %c0_i32_0 = arith.constant 0 : i32
    %c0_i32_1 = arith.constant 0 : i32
    return %c0_i32, %c0_i32_0 : i32, i32
  }
  func.func @transform_2(%arg0: i32) -> (i32, i32) {
    %c0_i32 = arith.constant 0 : i32
    %c0_i32_0 = arith.constant 0 : i32
    %c0_i32_1 = arith.constant 0 : i32
    return %c0_i32, %c0_i32_0 : i32, i32
  }
  func.func @transform_3(%arg0: i32) -> (i32, i32) {
    %c0_i32 = arith.constant 0 : i32
    %c0_i32_0 = arith.constant 0 : i32
    %c0_i32_1 = arith.constant 0 : i32
    return %c0_i32, %c0_i32_0 : i32, i32
  }
  func.func @transform_4(%arg0: i32) -> (i32, i32) {
    %c0_i32 = arith.constant 0 : i32
    %c0_i32_0 = arith.constant 0 : i32
    %c0_i32_1 = arith.constant 0 : i32
    return %c0_i32, %c0_i32_0 : i32, i32
  }
  func.func @transform_5(%arg0: i32) -> (i32, i32, i32) {
    %c0_i32 = arith.constant 0 : i32
    %c0_i32_0 = arith.constant 0 : i32
    %c0_i32_1 = arith.constant 0 : i32
    return %arg0, %c0_i32, %c0_i32_0 : i32, i32, i32
  }
}

</mosaic_0001>

<llo_original>
// kernel: tpu_custom_call.1
$region0: #{tpu_custom_call.1}
  #allocation0 [shape = 'u32[]', space=smem, size = 0x4, offset = 0x4, fixed_abs, tag = 'smem constant byte address 0x4 - core index']
  #allocation1 [shape = 'u32[72,128]{1,0:T(1,128)}', space=vmem, size = 0x9000, scoped, tag = 'internal scratch']
  %s0 = inlined_call_operand.vmem [shape: f32[2,128,32], index: 0, kind: input, shape index: {}]
  %s1 = inlined_call_operand.vmem [shape: f32[32,96], index: 1, kind: input, shape index: {}]
  %s2 = inlined_call_operand.vmem [shape: f32[1,96], index: 2, kind: input, shape index: {}]
  %s3 = inlined_call_operand.vmem [shape: f32[32,32], index: 3, kind: input, shape index: {}]
  %s4 = inlined_call_operand.vmem [shape: f32[1,32], index: 4, kind: input, shape index: {}]
  %s5 = inlined_call_operand.vmem [shape: f32[2,128,32], index: 5, kind: output, shape index: {}]
  %s6 = sld [smem:[#allocation0]]
  $region53: #{tpu_custom_call.1} parent=0
    _
  %s8 = ssub.s32 1, %s6
  %s9 = scalar_select 0, %s8, %s6
  loop: start=0, step=1, limit=4
  $region2: #{tpu_custom_call.1} parent=0 // loop_pre_header
    _
  $region3: #{tpu_custom_call.1} parent=0 // loop_header
    %s11 = sphi 0, %s15
    %p12 = scmp.ge.s32.totalorder %s11, 4
    %s21 = sphi 0, %s23
    %s24 = sphi 0, %s21
    %s25 = sphi 0, %s24
    %s41 = sphi 0, %s25
    %s45 = sphi 0, %s45
    %s47 = sphi 0, %s45
    %s48 = sphi 0, %s47
    %s62 = sphi 0, %s48
    %s66 = sphi 0, %s66
    %s68 = sphi 0, %s66
    %s69 = sphi 0, %s68
    %s83 = sphi 0, %s69
    %s87 = sphi 0, %s87
    %s89 = sphi 0, %s87
    %s90 = sphi 0, %s89
    %s104 = sphi 0, %s90
    %s108 = sphi 0, %s108
    %s110 = sphi 0, %s108
    %s111 = sphi 0, %s110
    %s125 = sphi 0, %s111
    %s131 = sphi 0, %s133
    %s134 = sphi 0, %s131
    %s135 = sphi 0, %s134
    %s151 = sphi 0, %s135
  $region4: #{tpu_custom_call.1} parent=0 // loop_header_branch
    %14 = sbr.rel (%p12) target = $region8
  $region5: #{tpu_custom_call.1} parent=0 // loop_body
    %s16 = ssub.s32 %s11, 1
    %s17 = ssub.s32 %s11, 2
    %s18 = sadd.s32 %s11, 1
    %s19 = ssub.s32 %s11, %s18
    %p20 = scmp.eq.s32.totalorder %s19, 0
    %s22 = sadd.s32 %s21, 1
    %s23 = scalar_select %p20, %s21, %s22
    %p26 = pneg %p20
    %p27 = scmp.eq.s32.totalorder %s11, 1
    %p28 = por %p26, %p27
    %p29 = scmp.ne.s32.totalorder %s21, %s24
    %p30 = scmp.eq.s32.totalorder %s11, 0
    %p31 = por %p29, %p30
    %p32 = scmp.ne.s32.totalorder %s21, %s24
    %p33 = scmp.eq.s32.totalorder %s16, 1
    %p34 = por %p32, %p33
    %p35 = scmp.ne.s32.totalorder %s24, %s25
    %p36 = scmp.eq.s32.totalorder %s16, 0
    %p37 = por %p35, %p36
    %p38 = scmp.ne.s32.totalorder %s24, %s25
    %p39 = scmp.eq.s32.totalorder %s17, 1
    %p40 = por %p38, %p39
    %p42 = scmp.ne.s32.totalorder %s25, %s41
    %p43 = scmp.eq.s32.totalorder %s17, 0
    %p44 = por %p42, %p43
    %s46 = sadd.s32 %s45, 1
    %p49 = scmp.eq.s32.totalorder %s11, 1
    %p50 = scmp.ne.s32.totalorder %s45, %s47
    %p51 = scmp.eq.s32.totalorder %s11, 0
    %p52 = por %p50, %p51
    %p53 = scmp.ne.s32.totalorder %s45, %s47
    %p54 = scmp.eq.s32.totalorder %s16, 1
    %p55 = por %p53, %p54
    %p56 = scmp.ne.s32.totalorder %s47, %s48
    %p57 = scmp.eq.s32.totalorder %s16, 0
    %p58 = por %p56, %p57
    %p59 = scmp.ne.s32.totalorder %s47, %s48
    %p60 = scmp.eq.s32.totalorder %s17, 1
    %p61 = por %p59, %p60
    %p63 = scmp.ne.s32.totalorder %s48, %s62
    %p64 = scmp.eq.s32.totalorder %s17, 0
    %p65 = por %p63, %p64
    %s67 = sadd.s32 %s66, 1
    %p70 = scmp.eq.s32.totalorder %s11, 1
    %p71 = scmp.ne.s32.totalorder %s66, %s68
    %p72 = scmp.eq.s32.totalorder %s11, 0
    %p73 = por %p71, %p72
    %p74 = scmp.ne.s32.totalorder %s66, %s68
    %p75 = scmp.eq.s32.totalorder %s16, 1
    %p76 = por %p74, %p75
    %p77 = scmp.ne.s32.totalorder %s68, %s69
    %p78 = scmp.eq.s32.totalorder %s16, 0
    %p79 = por %p77, %p78
    %p80 = scmp.ne.s32.totalorder %s68, %s69
    %p81 = scmp.eq.s32.totalorder %s17, 1
    %p82 = por %p80, %p81
    %p84 = scmp.ne.s32.totalorder %s69, %s83
    %p85 = scmp.eq.s32.totalorder %s17, 0
    %p86 = por %p84, %p85
    %s88 = sadd.s32 %s87, 1
    %p91 = scmp.eq.s32.totalorder %s11, 1
    %p92 = scmp.ne.s32.totalorder %s87, %s89
    %p93 = scmp.eq.s32.totalorder %s11, 0
    %p94 = por %p92, %p93
    %p95 = scmp.ne.s32.totalorder %s87, %s89
    %p96 = scmp.eq.s32.totalorder %s16, 1
    %p97 = por %p95, %p96
    %p98 = scmp.ne.s32.totalorder %s89, %s90
    %p99 = scmp.eq.s32.totalorder %s16, 0
    %p100 = por %p98, %p99
    %p101 = scmp.ne.s32.totalorder %s89, %s90
    %p102 = scmp.eq.s32.totalorder %s17, 1
    %p103 = por %p101, %p102
    %p105 = scmp.ne.s32.totalorder %s90, %s104
    %p106 = scmp.eq.s32.totalorder %s17, 0
    %p107 = por %p105, %p106
    %s109 = sadd.s32 %s108, 1
    %p112 = scmp.eq.s32.totalorder %s11, 1
    %p113 = scmp.ne.s32.totalorder %s108, %s110
    %p114 = scmp.eq.s32.totalorder %s11, 0
    %p115 = por %p113, %p114
    %p116 = scmp.ne.s32.totalorder %s108, %s110
    %p117 = scmp.eq.s32.totalorder %s16, 1
    %p118 = por %p116, %p117
    %p119 = scmp.ne.s32.totalorder %s110, %s111
    %p120 = scmp.eq.s32.totalorder %s16, 0
    %p121 = por %p119, %p120
    %p122 = scmp.ne.s32.totalorder %s110, %s111
    %p123 = scmp.eq.s32.totalorder %s17, 1
    %p124 = por %p122, %p123
    %p126 = scmp.ne.s32.totalorder %s111, %s125
    %p127 = scmp.eq.s32.totalorder %s17, 0
    %p128 = por %p126, %p127
    %s129 = ssub.s32 %s11, %s18
    %p130 = scmp.eq.s32.totalorder %s129, 0
    %s132 = sadd.s32 %s131, 1
    %s133 = scalar_select %p130, %s131, %s132
    %p136 = pneg %p130
    %p137 = scmp.eq.s32.totalorder %s11, 1
    %p138 = por %p136, %p137
    %p139 = scmp.ne.s32.totalorder %s131, %s134
    %p140 = scmp.eq.s32.totalorder %s11, 0
    %p141 = por %p139, %p140
    %p142 = scmp.ne.s32.totalorder %s131, %s134
    %p143 = scmp.eq.s32.totalorder %s16, 1
    %p144 = por %p142, %p143
    %p145 = scmp.ne.s32.totalorder %s134, %s135
    %p146 = scmp.eq.s32.totalorder %s16, 0
    %p147 = por %p145, %p146
    %p148 = scmp.ne.s32.totalorder %s134, %s135
    %p149 = scmp.eq.s32.totalorder %s17, 1
    %p150 = por %p148, %p149
    %p152 = scmp.ne.s32.totalorder %s135, %s151
    %p153 = scmp.eq.s32.totalorder %s17, 0
    %p154 = por %p152, %p153
    %p155 = scmp.le.s32.totalorder 1, %s11
    %p156 = scmp.lt.s32.totalorder %s11, 3
    %p157 = pnand %p155, %p156
    %p158 = pneg %p157
    // Predicated region
    $region9: #{tpu_custom_call.1} parent=5 // pred_check
      _
    $region10: #{tpu_custom_call.1} parent=5 // pred_check_branch
      %160 = sbr.rel (%p157) target = $region12
    $region11: #{tpu_custom_call.1} parent=5 // pred_region
      %s161 = ssub.s32 %s11, 1
      // Predicated region
      $region13: #{tpu_custom_call.1} parent=11 // pred_check
        %p162 = pneg %p58
      $region14: #{tpu_custom_call.1} parent=11 // pred_check_branch
        %164 = sbr.rel (%p162) target = $region16
      $region15: #{tpu_custom_call.1} parent=11 // pred_region
        _
      $region16: #{tpu_custom_call.1} parent=11 // pred_fallthru
        _
      // Predicated region
      $region17: #{tpu_custom_call.1} parent=11 // pred_check
        %p165 = pneg %p79
      $region18: #{tpu_custom_call.1} parent=11 // pred_check_branch
        %167 = sbr.rel (%p165) target = $region20
      $region19: #{tpu_custom_call.1} parent=11 // pred_region
        _
      $region20: #{tpu_custom_call.1} parent=11 // pred_fallthru
        _
      // Predicated region
      $region21: #{tpu_custom_call.1} parent=11 // pred_check
        %p168 = pneg %p100
      $region22: #{tpu_custom_call.1} parent=11 // pred_check_branch
        %170 = sbr.rel (%p168) target = $region24
      $region23: #{tpu_custom_call.1} parent=11 // pred_region
        _
      $region24: #{tpu_custom_call.1} parent=11 // pred_fallthru
        _
      // Predicated region
      $region25: #{tpu_custom_call.1} parent=11 // pred_check
        %p171 = pneg %p121
      $region26: #{tpu_custom_call.1} parent=11 // pred_check_branch
        %173 = sbr.rel (%p171) target = $region28
      $region27: #{tpu_custom_call.1} parent=11 // pred_region
        _
      $region28: #{tpu_custom_call.1} parent=11 // pred_fallthru
        _
    $region12: #{tpu_custom_call.1} parent=5 // pred_fallthru
      _
    %p174 = scmp.lt.s32.totalorder %s11, 2
    // Predicated region
    $region29: #{tpu_custom_call.1} parent=5 // pred_check
      %p175 = pneg %p174
    $region30: #{tpu_custom_call.1} parent=5 // pred_check_branch
      %177 = sbr.rel (%p175) target = $region32
    $region31: #{tpu_custom_call.1} parent=5 // pred_region
      // Predicated region
      $region33: #{tpu_custom_call.1} parent=31 // pred_check
        %p178 = pneg %p31
      $region34: #{tpu_custom_call.1} parent=31 // pred_check_branch
        %180 = sbr.rel (%p178) target = $region36
      $region35: #{tpu_custom_call.1} parent=31 // pred_region
        %p181 = scmp.lt.s32.totalorder %s11, 1
        %s182 = scalar_select %p181, %s11, 1
        %s183 = smul.addr %s182, 16
        %s184 = smul.addr %s183, 8
        %s185 = scalar_lea.vmem %s0, %s184
      $region36: #{tpu_custom_call.1} parent=31 // pred_fallthru
        _
    $region32: #{tpu_custom_call.1} parent=5 // pred_fallthru
      _
    %p186 = scmp.le.s32.totalorder 1, %s11
    %p187 = scmp.lt.s32.totalorder %s11, 3
    %p188 = pnand %p186, %p187
    %p189 = pneg %p188
    // Predicated region
    $region37: #{tpu_custom_call.1} parent=5 // pred_check
      _
    $region38: #{tpu_custom_call.1} parent=5 // pred_check_branch
      %191 = sbr.rel (%p188) target = $region40
    $region39: #{tpu_custom_call.1} parent=5 // pred_region
      %s192 = ssub.s32 %s11, 1
      %p193 = scmp.lt.s32.totalorder %s16, 1
      %s194 = scalar_select %p193, %s16, 1
      %s195 = smul.addr %s194, 16
      %s196 = smul.addr %s195, 8
      %s197 = scalar_lea.vmem %s0, %s196
      %p198 = pneg %p37
      %p199 = pneg %p34
      %p200 = pneg %p58
      %p201 = pneg %p55
      %p202 = pneg %p79
      %p203 = pneg %p76
      %p204 = pneg %p100
      %p205 = pneg %p97
      %p206 = pneg %p121
      %p207 = pneg %p118
      %p208 = pneg %p147
      %p209 = pneg %p144
      %p210 = scmp.lt.s32.totalorder %s16, 1
      %s211 = scalar_select %p210, %s16, 1
      %s212 = smul.addr %s211, 16
      %s213 = smul.addr %s212, 8
      %s214 = scalar_lea.vmem %s5, %s213
      %p215 = scmp.lt.s32.totalorder %s16, 1
      %s216 = scalar_select %p215, %s16, 1
      %s217 = smul.addr %s216, 16
      %s218 = smul.addr %s217, 8
      %s219 = scalar_lea.vmem %s0, %s218
      %p220 = scmp.lt.s32.totalorder %s16, 1
      %s221 = scalar_select %p220, %s16, 1
      %s222 = smul.addr %s221, 16
      %s223 = smul.addr %s222, 8
      %s224 = scalar_lea.vmem %s5, %s223
      %v225 = vld [vmem:[%s219] sm:$0xff]
      %v226 = vld [vmem:[%s219 + $0x8] sm:$0xff]
      %v227 = vld [vmem:[%s219 + $0x10] sm:$0xff]
      %v228 = vld [vmem:[%s219 + $0x18] sm:$0xff]
      %v229 = vld [vmem:[%s219 + $0x20] sm:$0xff]
      %v230 = vld [vmem:[%s219 + $0x28] sm:$0xff]
      %v231 = vld [vmem:[%s219 + $0x30] sm:$0xff]
      %v232 = vld [vmem:[%s219 + $0x38] sm:$0xff]
      %v233 = vld [vmem:[%s219 + $0x40] sm:$0xff]
      %v234 = vld [vmem:[%s219 + $0x48] sm:$0xff]
      %v235 = vld [vmem:[%s219 + $0x50] sm:$0xff]
      %v236 = vld [vmem:[%s219 + $0x58] sm:$0xff]
      %v237 = vld [vmem:[%s219 + $0x60] sm:$0xff]
      %v238 = vld [vmem:[%s219 + $0x68] sm:$0xff]
      %v239 = vld [vmem:[%s219 + $0x70] sm:$0xff]
      %v240 = vld [vmem:[%s219 + $0x78] sm:$0xff]
      %v241 = vld [vmem:[%s1] sm:$0xff]
      %v242 = vld [vmem:[%s1 + $0x8] sm:$0xff]
      %v243 = vld [vmem:[%s1 + $0x10] sm:$0xff]
      %v244 = vld [vmem:[%s1 + $0x18] sm:$0xff]
      %v245 = vld [vmem:[%s2] sm:$0x1]
      %v247 = vperm.slane %v245, 0
      %vm249 = vcmask 261120
      %v251 = vsel %vm249, %v225, 0
      %v254 = vsel %vm249, %v226, 0
      %v257 = vsel %vm249, %v227, 0
      %v260 = vsel %vm249, %v228, 0
      %v263 = vsel %vm249, %v229, 0
      %v266 = vsel %vm249, %v230, 0
      %v269 = vsel %vm249, %v231, 0
      %v272 = vsel %vm249, %v232, 0
      %v275 = vsel %vm249, %v233, 0
      %v278 = vsel %vm249, %v234, 0
      %v281 = vsel %vm249, %v235, 0
      %v284 = vsel %vm249, %v236, 0
      %v287 = vsel %vm249, %v237, 0
      %v290 = vsel %vm249, %v238, 0
      %v293 = vsel %vm249, %v239, 0
      %v296 = vsel %vm249, %v240, 0
      %298 = vmatpush.msra.mxu0 0.0
      %299 = vmatpush.msra.mxu0 0.0
      %300 = vmatpush.msra.mxu0 0.0
      %301 = vmatpush.msra.mxu0 0.0
      %302 = vmatpush.msra.mxu0 0.0
      %303 = vmatpush.msra.mxu0 0.0
      %304 = vmatpush.msra.mxu0 0.0
      %305 = vmatpush.msra.mxu0 0.0
      %306 = vmatpush.msra.mxu0 0.0
      %307 = vmatpush.msra.mxu0 0.0
      %308 = vmatpush.msra.mxu0 0.0
      %309 = vmatpush.msra.mxu0 0.0
      %310 = vmatpush.msra.mxu0 %v244
      %311 = vmatpush.msra.mxu0 %v243
      %312 = vmatpush.msra.mxu0 %v242
      %313 = vmatpush.msra.mxu0 %v241
      %314 = vmatmul.f32.gmra.mxu0 %v251
      %v315 = vpop.f32.mrf.mxu0
      %v316 = vadd.f32 %v247, %v315
      %317 = vmatmul.f32.gmra.mxu0 %v254
      %v318 = vpop.f32.mrf.mxu0
      %v319 = vadd.f32 %v247, %v318
      %320 = vmatmul.f32.gmra.mxu0 %v257
      %v321 = vpop.f32.mrf.mxu0
      %v322 = vadd.f32 %v247, %v321
      %323 = vmatmul.f32.gmra.mxu0 %v260
      %v324 = vpop.f32.mrf.mxu0
      %v325 = vadd.f32 %v247, %v324
      %326 = vmatmul.f32.gmra.mxu0 %v263
      %v327 = vpop.f32.mrf.mxu0
      %v328 = vadd.f32 %v247, %v327
      %329 = vmatmul.f32.gmra.mxu0 %v266
      %v330 = vpop.f32.mrf.mxu0
      %v331 = vadd.f32 %v247, %v330
      %332 = vmatmul.f32.gmra.mxu0 %v269
      %v333 = vpop.f32.mrf.mxu0
      %v334 = vadd.f32 %v247, %v333
      %335 = vmatmul.f32.gmra.mxu0 %v272
      %v336 = vpop.f32.mrf.mxu0
      %v337 = vadd.f32 %v247, %v336
      %338 = vmatmul.f32.gmra.mxu0 %v275
      %v339 = vpop.f32.mrf.mxu0
      %v340 = vadd.f32 %v247, %v339
      %341 = vmatmul.f32.gmra.mxu0 %v278
      %v342 = vpop.f32.mrf.mxu0
      %v343 = vadd.f32 %v247, %v342
      %344 = vmatmul.f32.gmra.mxu0 %v281
      %v345 = vpop.f32.mrf.mxu0
      %v346 = vadd.f32 %v247, %v345
      %347 = vmatmul.f32.gmra.mxu0 %v284
      %v348 = vpop.f32.mrf.mxu0
      %v349 = vadd.f32 %v247, %v348
      %350 = vmatmul.f32.gmra.mxu0 %v287
      %v351 = vpop.f32.mrf.mxu0
      %v352 = vadd.f32 %v247, %v351
      %353 = vmatmul.f32.gmra.mxu0 %v290
      %v354 = vpop.f32.mrf.mxu0
      %v355 = vadd.f32 %v247, %v354
      %356 = vmatmul.f32.gmra.mxu0 %v293
      %v357 = vpop.f32.mrf.mxu0
      %v358 = vadd.f32 %v247, %v357
      %359 = vmatmul.f32.gmra.mxu0 %v296
      %v360 = vpop.f32.mrf.mxu0
      %v361 = vadd.f32 %v247, %v360
      %362 = vdwg.mxu0
      %v363 = vlaneseq
      %v364 = vand.u32 %v363, 127
      %vm365 = vcmp.lt.s32.totalorder %v364, 8
      %382 = vrot.lane.b32.xlu0 %v316, 96
      %v383 = vpop.permute.xlu0 %382
      %384 = vrot.lane.b32.xlu0 %v319, 96
      %v385 = vpop.permute.xlu0 %384
      %386 = vrot.lane.b32.xlu0 %v322, 96
      %v387 = vpop.permute.xlu0 %386
      %388 = vrot.lane.b32.xlu0 %v325, 96
      %v389 = vpop.permute.xlu0 %388
      %390 = vrot.lane.b32.xlu0 %v328, 96
      %v391 = vpop.permute.xlu0 %390
      %392 = vrot.lane.b32.xlu0 %v331, 96
      %v393 = vpop.permute.xlu0 %392
      %394 = vrot.lane.b32.xlu0 %v334, 96
      %v395 = vpop.permute.xlu0 %394
      %396 = vrot.lane.b32.xlu0 %v337, 96
      %v397 = vpop.permute.xlu0 %396
      %398 = vrot.lane.b32.xlu0 %v340, 96
      %v399 = vpop.permute.xlu0 %398
      %400 = vrot.lane.b32.xlu0 %v343, 96
      %v401 = vpop.permute.xlu0 %400
      %402 = vrot.lane.b32.xlu0 %v346, 96
      %v403 = vpop.permute.xlu0 %402
      %404 = vrot.lane.b32.xlu0 %v349, 96
      %v405 = vpop.permute.xlu0 %404
      %406 = vrot.lane.b32.xlu0 %v352, 96
      %v407 = vpop.permute.xlu0 %406
      %408 = vrot.lane.b32.xlu0 %v355, 96
      %v409 = vpop.permute.xlu0 %408
      %410 = vrot.lane.b32.xlu0 %v358, 96
      %v411 = vpop.permute.xlu0 %410
      %412 = vrot.lane.b32.xlu0 %v361, 96
      %v413 = vpop.permute.xlu0 %412
      %vm414 = vcmask 64512
      %v415 = vsel %vm414, %v316, 0
      %v417 = vsel %vm414, %v319, 0
      %v419 = vsel %vm414, %v322, 0
      %v421 = vsel %vm414, %v325, 0
      %v423 = vsel %vm414, %v328, 0
      %v425 = vsel %vm414, %v331, 0
      %v427 = vsel %vm414, %v334, 0
      %v429 = vsel %vm414, %v337, 0
      %v431 = vsel %vm414, %v340, 0
      %v433 = vsel %vm414, %v343, 0
      %v435 = vsel %vm414, %v346, 0
      %v437 = vsel %vm414, %v349, 0
      %v439 = vsel %vm414, %v352, 0
      %v441 = vsel %vm414, %v355, 0
      %v443 = vsel %vm414, %v358, 0
      %v445 = vsel %vm414, %v361, 0
      %v447 = vsel %vm414, %v383, 0
      %v449 = vsel %vm414, %v385, 0
      %v451 = vsel %vm414, %v387, 0
      %v453 = vsel %vm414, %v389, 0
      %v455 = vsel %vm414, %v391, 0
      %v457 = vsel %vm414, %v393, 0
      %v459 = vsel %vm414, %v395, 0
      %v461 = vsel %vm414, %v397, 0
      %v463 = vsel %vm414, %v399, 0
      %v465 = vsel %vm414, %v401, 0
      %v467 = vsel %vm414, %v403, 0
      %v469 = vsel %vm414, %v405, 0
      %v471 = vsel %vm414, %v407, 0
      %v473 = vsel %vm414, %v409, 0
      %v475 = vsel %vm414, %v411, 0
      %v477 = vsel %vm414, %v413, 0
      %479 = vmatpush.xpose.msra.mxu0 %v477
      %480 = vmatpush.xpose.msra.mxu0 %v475
      %481 = vmatpush.xpose.msra.mxu0 %v473
      %482 = vmatpush.xpose.msra.mxu0 %v471
      %483 = vmatpush.xpose.msra.mxu0 %v469
      %484 = vmatpush.xpose.msra.mxu0 %v467
      %485 = vmatpush.xpose.msra.mxu0 %v465
      %486 = vmatpush.xpose.msra.mxu0 %v463
      %487 = vmatpush.xpose.msra.mxu0 %v461
      %488 = vmatpush.xpose.msra.mxu0 %v459
      %489 = vmatpush.xpose.msra.mxu0 %v457
      %490 = vmatpush.xpose.msra.mxu0 %v455
      %491 = vmatpush.xpose.msra.mxu0 %v453
      %492 = vmatpush.xpose.msra.mxu0 %v451
      %493 = vmatpush.xpose.msra.mxu0 %v449
      %494 = vmatpush.xpose.msra.mxu0 %v447
      %495 = vmatmul.f32.gmra.mxu0 %v415
      %v496 = vpop.f32.mrf.mxu0
      %v497 = vadd.f32 0.0, %v496
      %498 = vmatmul.f32.gmra.mxu0 %v417
      %v499 = vpop.f32.mrf.mxu0
      %v500 = vadd.f32 0.0, %v499
      %501 = vmatmul.f32.gmra.mxu0 %v419
      %v502 = vpop.f32.mrf.mxu0
      %v503 = vadd.f32 0.0, %v502
      %504 = vmatmul.f32.gmra.mxu0 %v421
      %v505 = vpop.f32.mrf.mxu0
      %v506 = vadd.f32 0.0, %v505
      %507 = vmatmul.f32.gmra.mxu0 %v423
      %v508 = vpop.f32.mrf.mxu0
      %v509 = vadd.f32 0.0, %v508
      %510 = vmatmul.f32.gmra.mxu0 %v425
      %v511 = vpop.f32.mrf.mxu0
      %v512 = vadd.f32 0.0, %v511
      %513 = vmatmul.f32.gmra.mxu0 %v427
      %v514 = vpop.f32.mrf.mxu0
      %v515 = vadd.f32 0.0, %v514
      %516 = vmatmul.f32.gmra.mxu0 %v429
      %v517 = vpop.f32.mrf.mxu0
      %v518 = vadd.f32 0.0, %v517
      %519 = vmatmul.f32.gmra.mxu0 %v431
      %v520 = vpop.f32.mrf.mxu0
      %v521 = vadd.f32 0.0, %v520
      %522 = vmatmul.f32.gmra.mxu0 %v433
      %v523 = vpop.f32.mrf.mxu0
      %v524 = vadd.f32 0.0, %v523
      %525 = vmatmul.f32.gmra.mxu0 %v435
      %v526 = vpop.f32.mrf.mxu0
      %v527 = vadd.f32 0.0, %v526
      %528 = vmatmul.f32.gmra.mxu0 %v437
      %v529 = vpop.f32.mrf.mxu0
      %v530 = vadd.f32 0.0, %v529
      %531 = vmatmul.f32.gmra.mxu0 %v439
      %v532 = vpop.f32.mrf.mxu0
      %v533 = vadd.f32 0.0, %v532
      %534 = vmatmul.f32.gmra.mxu0 %v441
      %v535 = vpop.f32.mrf.mxu0
      %v536 = vadd.f32 0.0, %v535
      %537 = vmatmul.f32.gmra.mxu0 %v443
      %v538 = vpop.f32.mrf.mxu0
      %v539 = vadd.f32 0.0, %v538
      %540 = vmatmul.f32.gmra.mxu0 %v445
      %v541 = vpop.f32.mrf.mxu0
      %v542 = vadd.f32 0.0, %v541
      %543 = vdwg.mxu0
      %v544 = vsel %vm365, 1, 0
      %vm545 = vcmp.eq.s32.totalorder %v544, 1
      %v546 = vsel %vm545, %v497, -1e+30
      %v547 = vsel %vm545, %v500, -1e+30
      %v548 = vsel %vm545, %v503, -1e+30
      %v549 = vsel %vm545, %v506, -1e+30
      %v550 = vsel %vm545, %v509, -1e+30
      %v551 = vsel %vm545, %v512, -1e+30
      %v552 = vsel %vm545, %v515, -1e+30
      %v553 = vsel %vm545, %v518, -1e+30
      %v554 = vsel %vm545, %v521, -1e+30
      %v555 = vsel %vm545, %v524, -1e+30
      %v556 = vsel %vm545, %v527, -1e+30
      %v557 = vsel %vm545, %v530, -1e+30
      %v558 = vsel %vm545, %v533, -1e+30
      %v559 = vsel %vm545, %v536, -1e+30
      %v560 = vsel %vm545, %v539, -1e+30
      %v561 = vsel %vm545, %v542, -1e+30
      %562 = vmax.xlane.f32.xlu0 %v546
      %v563 = vpop.xlane.xlu0 %562
      %564 = vmax.xlane.f32.xlu0 %v547
      %v565 = vpop.xlane.xlu0 %564
      %566 = vmax.xlane.f32.xlu0 %v548
      %v567 = vpop.xlane.xlu0 %566
      %568 = vmax.xlane.f32.xlu0 %v549
      %v569 = vpop.xlane.xlu0 %568
      %570 = vmax.xlane.f32.xlu0 %v550
      %v571 = vpop.xlane.xlu0 %570
      %572 = vmax.xlane.f32.xlu0 %v551
      %v573 = vpop.xlane.xlu0 %572
      %574 = vmax.xlane.f32.xlu0 %v552
      %v575 = vpop.xlane.xlu0 %574
      %576 = vmax.xlane.f32.xlu0 %v553
      %v577 = vpop.xlane.xlu0 %576
      %578 = vmax.xlane.f32.xlu0 %v554
      %v579 = vpop.xlane.xlu0 %578
      %580 = vmax.xlane.f32.xlu0 %v555
      %v581 = vpop.xlane.xlu0 %580
      %582 = vmax.xlane.f32.xlu0 %v556
      %v583 = vpop.xlane.xlu0 %582
      %584 = vmax.xlane.f32.xlu0 %v557
      %v585 = vpop.xlane.xlu0 %584
      %586 = vmax.xlane.f32.xlu0 %v558
      %v587 = vpop.xlane.xlu0 %586
      %588 = vmax.xlane.f32.xlu0 %v559
      %v589 = vpop.xlane.xlu0 %588
      %590 = vmax.xlane.f32.xlu0 %v560
      %v591 = vpop.xlane.xlu0 %590
      %592 = vmax.xlane.f32.xlu0 %v561
      %v593 = vpop.xlane.xlu0 %592
      %v594 = vsub.f32 %v546, %v563
      %v595 = vsub.f32 %v547, %v565
      %v596 = vsub.f32 %v548, %v567
      %v597 = vsub.f32 %v549, %v569
      %v598 = vsub.f32 %v550, %v571
      %v599 = vsub.f32 %v551, %v573
      %v600 = vsub.f32 %v552, %v575
      %v601 = vsub.f32 %v553, %v577
      %v602 = vsub.f32 %v554, %v579
      %v603 = vsub.f32 %v555, %v581
      %v604 = vsub.f32 %v556, %v583
      %v605 = vsub.f32 %v557, %v585
      %v606 = vsub.f32 %v558, %v587
      %v607 = vsub.f32 %v559, %v589
      %v608 = vsub.f32 %v560, %v591
      %v609 = vsub.f32 %v561, %v593
      %v610 = vmul.f32 %v594, 1.442695
      %v611 = vpow.pop %v610
      %v612 = vmul.f32 %v595, 1.442695
      %v613 = vpow.pop %v612
      %v614 = vmul.f32 %v596, 1.442695
      %v615 = vpow.pop %v614
      %v616 = vmul.f32 %v597, 1.442695
      %v617 = vpow.pop %v616
      %v618 = vmul.f32 %v598, 1.442695
      %v619 = vpow.pop %v618
      %v620 = vmul.f32 %v599, 1.442695
      %v621 = vpow.pop %v620
      %v622 = vmul.f32 %v600, 1.442695
      %v623 = vpow.pop %v622
      %v624 = vmul.f32 %v601, 1.442695
      %v625 = vpow.pop %v624
      %v626 = vmul.f32 %v602, 1.442695
      %v627 = vpow.pop %v626
      %v628 = vmul.f32 %v603, 1.442695
      %v629 = vpow.pop %v628
      %v630 = vmul.f32 %v604, 1.442695
      %v631 = vpow.pop %v630
      %v632 = vmul.f32 %v605, 1.442695
      %v633 = vpow.pop %v632
      %v634 = vmul.f32 %v606, 1.442695
      %v635 = vpow.pop %v634
      %v636 = vmul.f32 %v607, 1.442695
      %v637 = vpow.pop %v636
      %v638 = vmul.f32 %v608, 1.442695
      %v639 = vpow.pop %v638
      %v640 = vmul.f32 %v609, 1.442695
      %v641 = vpow.pop %v640
      %642 = vadd.xlane.f32.xlu0 %v611
      %v643 = vpop.xlane.xlu0 %642
      %644 = vadd.xlane.f32.xlu0 %v613
      %v645 = vpop.xlane.xlu0 %644
      %646 = vadd.xlane.f32.xlu0 %v615
      %v647 = vpop.xlane.xlu0 %646
      %648 = vadd.xlane.f32.xlu0 %v617
      %v649 = vpop.xlane.xlu0 %648
      %650 = vadd.xlane.f32.xlu0 %v619
      %v651 = vpop.xlane.xlu0 %650
      %652 = vadd.xlane.f32.xlu0 %v621
      %v653 = vpop.xlane.xlu0 %652
      %654 = vadd.xlane.f32.xlu0 %v623
      %v655 = vpop.xlane.xlu0 %654
      %656 = vadd.xlane.f32.xlu0 %v625
      %v657 = vpop.xlane.xlu0 %656
      %658 = vadd.xlane.f32.xlu0 %v627
      %v659 = vpop.xlane.xlu0 %658
      %660 = vadd.xlane.f32.xlu0 %v629
      %v661 = vpop.xlane.xlu0 %660
      %662 = vadd.xlane.f32.xlu0 %v631
      %v663 = vpop.xlane.xlu0 %662
      %664 = vadd.xlane.f32.xlu0 %v633
      %v665 = vpop.xlane.xlu0 %664
      %666 = vadd.xlane.f32.xlu0 %v635
      %v667 = vpop.xlane.xlu0 %666
      %668 = vadd.xlane.f32.xlu0 %v637
      %v669 = vpop.xlane.xlu0 %668
      %670 = vadd.xlane.f32.xlu0 %v639
      %v671 = vpop.xlane.xlu0 %670
      %672 = vadd.xlane.f32.xlu0 %v641
      %v673 = vpop.xlane.xlu0 %672
      %v674 = vrcp.pop %v643
      %v675 = vrcp.pop %v645
      %v676 = vrcp.pop %v647
      %v677 = vrcp.pop %v649
      %v678 = vrcp.pop %v651
      %v679 = vrcp.pop %v653
      %v680 = vrcp.pop %v655
      %v681 = vrcp.pop %v657
      %v682 = vrcp.pop %v659
      %v683 = vrcp.pop %v661
      %v684 = vrcp.pop %v663
      %v685 = vrcp.pop %v665
      %v686 = vrcp.pop %v667
      %v687 = vrcp.pop %v669
      %v688 = vrcp.pop %v671
      %v689 = vrcp.pop %v673
      %v690 = vmul.f32 %v611, %v674
      %v691 = vmul.f32 %v613, %v675
      %v692 = vmul.f32 %v615, %v676
      %v693 = vmul.f32 %v617, %v677
      %v694 = vmul.f32 %v619, %v678
      %v695 = vmul.f32 %v621, %v679
      %v696 = vmul.f32 %v623, %v680
      %v697 = vmul.f32 %v625, %v681
      %v698 = vmul.f32 %v627, %v682
      %v699 = vmul.f32 %v629, %v683
      %v700 = vmul.f32 %v631, %v684
      %v701 = vmul.f32 %v633, %v685
      %v702 = vmul.f32 %v635, %v686
      %v703 = vmul.f32 %v637, %v687
      %v704 = vmul.f32 %v639, %v688
      %v705 = vmul.f32 %v641, %v689
      %706 = vrot.lane.b32.xlu0 %v316, 64
      %v707 = vpop.permute.xlu0 %706
      %708 = vrot.lane.b32.xlu0 %v319, 64
      %v709 = vpop.permute.xlu0 %708
      %710 = vrot.lane.b32.xlu0 %v322, 64
      %v711 = vpop.permute.xlu0 %710
      %712 = vrot.lane.b32.xlu0 %v325, 64
      %v713 = vpop.permute.xlu0 %712
      %714 = vrot.lane.b32.xlu0 %v328, 64
      %v715 = vpop.permute.xlu0 %714
      %716 = vrot.lane.b32.xlu0 %v331, 64
      %v717 = vpop.permute.xlu0 %716
      %718 = vrot.lane.b32.xlu0 %v334, 64
      %v719 = vpop.permute.xlu0 %718
      %720 = vrot.lane.b32.xlu0 %v337, 64
      %v721 = vpop.permute.xlu0 %720
      %722 = vrot.lane.b32.xlu0 %v340, 64
      %v723 = vpop.permute.xlu0 %722
      %724 = vrot.lane.b32.xlu0 %v343, 64
      %v725 = vpop.permute.xlu0 %724
      %726 = vrot.lane.b32.xlu0 %v346, 64
      %v727 = vpop.permute.xlu0 %726
      %728 = vrot.lane.b32.xlu0 %v349, 64
      %v729 = vpop.permute.xlu0 %728
      %730 = vrot.lane.b32.xlu0 %v352, 64
      %v731 = vpop.permute.xlu0 %730
      %732 = vrot.lane.b32.xlu0 %v355, 64
      %v733 = vpop.permute.xlu0 %732
      %734 = vrot.lane.b32.xlu0 %v358, 64
      %v735 = vpop.permute.xlu0 %734
      %736 = vrot.lane.b32.xlu0 %v361, 64
      %v737 = vpop.permute.xlu0 %736
      %754 = vmatpush.msra.mxu0 %v737
      %755 = vmatpush.msra.mxu0 %v735
      %756 = vmatpush.msra.mxu0 %v733
      %757 = vmatpush.msra.mxu0 %v731
      %758 = vmatpush.msra.mxu0 %v729
      %759 = vmatpush.msra.mxu0 %v727
      %760 = vmatpush.msra.mxu0 %v725
      %761 = vmatpush.msra.mxu0 %v723
      %762 = vmatpush.msra.mxu0 %v721
      %763 = vmatpush.msra.mxu0 %v719
      %764 = vmatpush.msra.mxu0 %v717
      %765 = vmatpush.msra.mxu0 %v715
      %766 = vmatpush.msra.mxu0 %v713
      %767 = vmatpush.msra.mxu0 %v711
      %768 = vmatpush.msra.mxu0 %v709
      %769 = vmatpush.msra.mxu0 %v707
      %770 = vmatmul.f32.gmra.mxu0 %v690
      %v771 = vpop.f32.mrf.mxu0
      %v772 = vadd.f32 0.0, %v771
      %773 = vmatmul.f32.gmra.mxu0 %v691
      %v774 = vpop.f32.mrf.mxu0
      %v775 = vadd.f32 0.0, %v774
      %776 = vmatmul.f32.gmra.mxu0 %v692
      %v777 = vpop.f32.mrf.mxu0
      %v778 = vadd.f32 0.0, %v777
      %779 = vmatmul.f32.gmra.mxu0 %v693
      %v780 = vpop.f32.mrf.mxu0
      %v781 = vadd.f32 0.0, %v780
      %782 = vmatmul.f32.gmra.mxu0 %v694
      %v783 = vpop.f32.mrf.mxu0
      %v784 = vadd.f32 0.0, %v783
      %785 = vmatmul.f32.gmra.mxu0 %v695
      %v786 = vpop.f32.mrf.mxu0
      %v787 = vadd.f32 0.0, %v786
      %788 = vmatmul.f32.gmra.mxu0 %v696
      %v789 = vpop.f32.mrf.mxu0
      %v790 = vadd.f32 0.0, %v789
      %791 = vmatmul.f32.gmra.mxu0 %v697
      %v792 = vpop.f32.mrf.mxu0
      %v793 = vadd.f32 0.0, %v792
      %794 = vmatmul.f32.gmra.mxu0 %v698
      %v795 = vpop.f32.mrf.mxu0
      %v796 = vadd.f32 0.0, %v795
      %797 = vmatmul.f32.gmra.mxu0 %v699
      %v798 = vpop.f32.mrf.mxu0
      %v799 = vadd.f32 0.0, %v798
      %800 = vmatmul.f32.gmra.mxu0 %v700
      %v801 = vpop.f32.mrf.mxu0
      %v802 = vadd.f32 0.0, %v801
      %803 = vmatmul.f32.gmra.mxu0 %v701
      %v804 = vpop.f32.mrf.mxu0
      %v805 = vadd.f32 0.0, %v804
      %806 = vmatmul.f32.gmra.mxu0 %v702
      %v807 = vpop.f32.mrf.mxu0
      %v808 = vadd.f32 0.0, %v807
      %809 = vmatmul.f32.gmra.mxu0 %v703
      %v810 = vpop.f32.mrf.mxu0
      %v811 = vadd.f32 0.0, %v810
      %812 = vmatmul.f32.gmra.mxu0 %v704
      %v813 = vpop.f32.mrf.mxu0
      %v814 = vadd.f32 0.0, %v813
      %815 = vmatmul.f32.gmra.mxu0 %v705
      %v816 = vpop.f32.mrf.mxu0
      %v817 = vadd.f32 0.0, %v816
      %818 = vdwg.mxu0
      %v819 = vld [vmem:[%s3] sm:$0xff]
      %820 = vrot.lane.b32.xlu0 %v316, 120
      %v821 = vpop.permute.xlu0 %820
      %822 = vrot.lane.b32.xlu0 %v319, 120
      %v823 = vpop.permute.xlu0 %822
      %824 = vrot.lane.b32.xlu0 %v322, 120
      %v825 = vpop.permute.xlu0 %824
      %826 = vrot.lane.b32.xlu0 %v325, 120
      %v827 = vpop.permute.xlu0 %826
      %828 = vrot.lane.b32.xlu0 %v328, 120
      %v829 = vpop.permute.xlu0 %828
      %830 = vrot.lane.b32.xlu0 %v331, 120
      %v831 = vpop.permute.xlu0 %830
      %832 = vrot.lane.b32.xlu0 %v334, 120
      %v833 = vpop.permute.xlu0 %832
      %834 = vrot.lane.b32.xlu0 %v337, 120
      %v835 = vpop.permute.xlu0 %834
      %836 = vrot.lane.b32.xlu0 %v340, 120
      %v837 = vpop.permute.xlu0 %836
      %838 = vrot.lane.b32.xlu0 %v343, 120
      %v839 = vpop.permute.xlu0 %838
      %840 = vrot.lane.b32.xlu0 %v346, 120
      %v841 = vpop.permute.xlu0 %840
      %842 = vrot.lane.b32.xlu0 %v349, 120
      %v843 = vpop.permute.xlu0 %842
      %844 = vrot.lane.b32.xlu0 %v352, 120
      %v845 = vpop.permute.xlu0 %844
      %846 = vrot.lane.b32.xlu0 %v355, 120
      %v847 = vpop.permute.xlu0 %846
      %848 = vrot.lane.b32.xlu0 %v358, 120
      %v849 = vpop.permute.xlu0 %848
      %850 = vrot.lane.b32.xlu0 %v361, 120
      %v851 = vpop.permute.xlu0 %850
      %852 = vrot.lane.b32.xlu0 %v316, 88
      %v853 = vpop.permute.xlu0 %852
      %854 = vrot.lane.b32.xlu0 %v319, 88
      %v855 = vpop.permute.xlu0 %854
      %856 = vrot.lane.b32.xlu0 %v322, 88
      %v857 = vpop.permute.xlu0 %856
      %858 = vrot.lane.b32.xlu0 %v325, 88
      %v859 = vpop.permute.xlu0 %858
      %860 = vrot.lane.b32.xlu0 %v328, 88
      %v861 = vpop.permute.xlu0 %860
      %862 = vrot.lane.b32.xlu0 %v331, 88
      %v863 = vpop.permute.xlu0 %862
      %864 = vrot.lane.b32.xlu0 %v334, 88
      %v865 = vpop.permute.xlu0 %864
      %866 = vrot.lane.b32.xlu0 %v337, 88
      %v867 = vpop.permute.xlu0 %866
      %868 = vrot.lane.b32.xlu0 %v340, 88
      %v869 = vpop.permute.xlu0 %868
      %870 = vrot.lane.b32.xlu0 %v343, 88
      %v871 = vpop.permute.xlu0 %870
      %872 = vrot.lane.b32.xlu0 %v346, 88
      %v873 = vpop.permute.xlu0 %872
      %874 = vrot.lane.b32.xlu0 %v349, 88
      %v875 = vpop.permute.xlu0 %874
      %876 = vrot.lane.b32.xlu0 %v352, 88
      %v877 = vpop.permute.xlu0 %876
      %878 = vrot.lane.b32.xlu0 %v355, 88
      %v879 = vpop.permute.xlu0 %878
      %880 = vrot.lane.b32.xlu0 %v358, 88
      %v881 = vpop.permute.xlu0 %880
      %882 = vrot.lane.b32.xlu0 %v361, 88
      %v883 = vpop.permute.xlu0 %882
      %v884 = vsel %vm414, %v821, 0
      %v886 = vsel %vm414, %v823, 0
      %v888 = vsel %vm414, %v825, 0
      %v890 = vsel %vm414, %v827, 0
      %v892 = vsel %vm414, %v829, 0
      %v894 = vsel %vm414, %v831, 0
      %v896 = vsel %vm414, %v833, 0
      %v898 = vsel %vm414, %v835, 0
      %v900 = vsel %vm414, %v837, 0
      %v902 = vsel %vm414, %v839, 0
      %v904 = vsel %vm414, %v841, 0
      %v906 = vsel %vm414, %v843, 0
      %v908 = vsel %vm414, %v845, 0
      %v910 = vsel %vm414, %v847, 0
      %v912 = vsel %vm414, %v849, 0
      %v914 = vsel %vm414, %v851, 0
      %v916 = vsel %vm414, %v853, 0
      %v918 = vsel %vm414, %v855, 0
      %v920 = vsel %vm414, %v857, 0
      %v922 = vsel %vm414, %v859, 0
      %v924 = vsel %vm414, %v861, 0
      %v926 = vsel %vm414, %v863, 0
      %v928 = vsel %vm414, %v865, 0
      %v930 = vsel %vm414, %v867, 0
      %v932 = vsel %vm414, %v869, 0
      %v934 = vsel %vm414, %v871, 0
      %v936 = vsel %vm414, %v873, 0
      %v938 = vsel %vm414, %v875, 0
      %v940 = vsel %vm414, %v877, 0
      %v942 = vsel %vm414, %v879, 0
      %v944 = vsel %vm414, %v881, 0
      %v946 = vsel %vm414, %v883, 0
      %948 = vmatpush.xpose.msra.mxu0 %v946
      %949 = vmatpush.xpose.msra.mxu0 %v944
      %950 = vmatpush.xpose.msra.mxu0 %v942
      %951 = vmatpush.xpose.msra.mxu0 %v940
      %952 = vmatpush.xpose.msra.mxu0 %v938
      %953 = vmatpush.xpose.msra.mxu0 %v936
      %954 = vmatpush.xpose.msra.mxu0 %v934
      %955 = vmatpush.xpose.msra.mxu0 %v932
      %956 = vmatpush.xpose.msra.mxu0 %v930
      %957 = vmatpush.xpose.msra.mxu0 %v928
      %958 = vmatpush.xpose.msra.mxu0 %v926
      %959 = vmatpush.xpose.msra.mxu0 %v924
      %960 = vmatpush.xpose.msra.mxu0 %v922
      %961 = vmatpush.xpose.msra.mxu0 %v920
      %962 = vmatpush.xpose.msra.mxu0 %v918
      %963 = vmatpush.xpose.msra.mxu0 %v916
      %964 = vmatmul.f32.gmra.mxu0 %v884
      %v965 = vpop.f32.mrf.mxu0
      %v966 = vadd.f32 0.0, %v965
      %967 = vmatmul.f32.gmra.mxu0 %v886
      %v968 = vpop.f32.mrf.mxu0
      %v969 = vadd.f32 0.0, %v968
      %970 = vmatmul.f32.gmra.mxu0 %v888
      %v971 = vpop.f32.mrf.mxu0
      %v972 = vadd.f32 0.0, %v971
      %973 = vmatmul.f32.gmra.mxu0 %v890
      %v974 = vpop.f32.mrf.mxu0
      %v975 = vadd.f32 0.0, %v974
      %976 = vmatmul.f32.gmra.mxu0 %v892
      %v977 = vpop.f32.mrf.mxu0
      %v978 = vadd.f32 0.0, %v977
      %979 = vmatmul.f32.gmra.mxu0 %v894
      %v980 = vpop.f32.mrf.mxu0
      %v981 = vadd.f32 0.0, %v980
      %982 = vmatmul.f32.gmra.mxu0 %v896
      %v983 = vpop.f32.mrf.mxu0
      %v984 = vadd.f32 0.0, %v983
      %985 = vmatmul.f32.gmra.mxu0 %v898
      %v986 = vpop.f32.mrf.mxu0
      %v987 = vadd.f32 0.0, %v986
      %988 = vmatmul.f32.gmra.mxu0 %v900
      %v989 = vpop.f32.mrf.mxu0
      %v990 = vadd.f32 0.0, %v989
      %991 = vmatmul.f32.gmra.mxu0 %v902
      %v992 = vpop.f32.mrf.mxu0
      %v993 = vadd.f32 0.0, %v992
      %994 = vmatmul.f32.gmra.mxu0 %v904
      %v995 = vpop.f32.mrf.mxu0
      %v996 = vadd.f32 0.0, %v995
      %997 = vmatmul.f32.gmra.mxu0 %v906
      %v998 = vpop.f32.mrf.mxu0
      %v999 = vadd.f32 0.0, %v998
      %1000 = vmatmul.f32.gmra.mxu0 %v908
      %v1001 = vpop.f32.mrf.mxu0
      %v1002 = vadd.f32 0.0, %v1001
      %1003 = vmatmul.f32.gmra.mxu0 %v910
      %v1004 = vpop.f32.mrf.mxu0
      %v1005 = vadd.f32 0.0, %v1004
      %1006 = vmatmul.f32.gmra.mxu0 %v912
      %v1007 = vpop.f32.mrf.mxu0
      %v1008 = vadd.f32 0.0, %v1007
      %1009 = vmatmul.f32.gmra.mxu0 %v914
      %v1010 = vpop.f32.mrf.mxu0
      %v1011 = vadd.f32 0.0, %v1010
      %1012 = vdwg.mxu0
      %v1013 = vsel %vm545, %v966, -1e+30
      %v1014 = vsel %vm545, %v969, -1e+30
      %v1015 = vsel %vm545, %v972, -1e+30
      %v1016 = vsel %vm545, %v975, -1e+30
      %v1017 = vsel %vm545, %v978, -1e+30
      %v1018 = vsel %vm545, %v981, -1e+30
      %v1019 = vsel %vm545, %v984, -1e+30
      %v1020 = vsel %vm545, %v987, -1e+30
      %v1021 = vsel %vm545, %v990, -1e+30
      %v1022 = vsel %vm545, %v993, -1e+30
      %v1023 = vsel %vm545, %v996, -1e+30
      %v1024 = vsel %vm545, %v999, -1e+30
      %v1025 = vsel %vm545, %v1002, -1e+30
      %v1026 = vsel %vm545, %v1005, -1e+30
      %v1027 = vsel %vm545, %v1008, -1e+30
      %v1028 = vsel %vm545, %v1011, -1e+30
      %1029 = vmax.xlane.f32.xlu0 %v1013
      %v1030 = vpop.xlane.xlu0 %1029
      %1031 = vmax.xlane.f32.xlu0 %v1014
      %v1032 = vpop.xlane.xlu0 %1031
      %1033 = vmax.xlane.f32.xlu0 %v1015
      %v1034 = vpop.xlane.xlu0 %1033
      %1035 = vmax.xlane.f32.xlu0 %v1016
      %v1036 = vpop.xlane.xlu0 %1035
      %1037 = vmax.xlane.f32.xlu0 %v1017
      %v1038 = vpop.xlane.xlu0 %1037
      %1039 = vmax.xlane.f32.xlu0 %v1018
      %v1040 = vpop.xlane.xlu0 %1039
      %1041 = vmax.xlane.f32.xlu0 %v1019
      %v1042 = vpop.xlane.xlu0 %1041
      %1043 = vmax.xlane.f32.xlu0 %v1020
      %v1044 = vpop.xlane.xlu0 %1043
      %1045 = vmax.xlane.f32.xlu0 %v1021
      %v1046 = vpop.xlane.xlu0 %1045
      %1047 = vmax.xlane.f32.xlu0 %v1022
      %v1048 = vpop.xlane.xlu0 %1047
      %1049 = vmax.xlane.f32.xlu0 %v1023
      %v1050 = vpop.xlane.xlu0 %1049
      %1051 = vmax.xlane.f32.xlu0 %v1024
      %v1052 = vpop.xlane.xlu0 %1051
      %1053 = vmax.xlane.f32.xlu0 %v1025
      %v1054 = vpop.xlane.xlu0 %1053
      %1055 = vmax.xlane.f32.xlu0 %v1026
      %v1056 = vpop.xlane.xlu0 %1055
      %1057 = vmax.xlane.f32.xlu0 %v1027
      %v1058 = vpop.xlane.xlu0 %1057
      %1059 = vmax.xlane.f32.xlu0 %v1028
      %v1060 = vpop.xlane.xlu0 %1059
      %v1061 = vsub.f32 %v1013, %v1030
      %v1062 = vsub.f32 %v1014, %v1032
      %v1063 = vsub.f32 %v1015, %v1034
      %v1064 = vsub.f32 %v1016, %v1036
      %v1065 = vsub.f32 %v1017, %v1038
      %v1066 = vsub.f32 %v1018, %v1040
      %v1067 = vsub.f32 %v1019, %v1042
      %v1068 = vsub.f32 %v1020, %v1044
      %v1069 = vsub.f32 %v1021, %v1046
      %v1070 = vsub.f32 %v1022, %v1048
      %v1071 = vsub.f32 %v1023, %v1050
      %v1072 = vsub.f32 %v1024, %v1052
      %v1073 = vsub.f32 %v1025, %v1054
      %v1074 = vsub.f32 %v1026, %v1056
      %v1075 = vsub.f32 %v1027, %v1058
      %v1076 = vsub.f32 %v1028, %v1060
      %v1077 = vmul.f32 %v1061, 1.442695
      %v1078 = vpow.pop %v1077
      %v1079 = vmul.f32 %v1062, 1.442695
      %v1080 = vpow.pop %v1079
      %v1081 = vmul.f32 %v1063, 1.442695
      %v1082 = vpow.pop %v1081
      %v1083 = vmul.f32 %v1064, 1.442695
      %v1084 = vpow.pop %v1083
      %v1085 = vmul.f32 %v1065, 1.442695
      %v1086 = vpow.pop %v1085
      %v1087 = vmul.f32 %v1066, 1.442695
      %v1088 = vpow.pop %v1087
      %v1089 = vmul.f32 %v1067, 1.442695
      %v1090 = vpow.pop %v1089
      %v1091 = vmul.f32 %v1068, 1.442695
      %v1092 = vpow.pop %v1091
      %v1093 = vmul.f32 %v1069, 1.442695
      %v1094 = vpow.pop %v1093
      %v1095 = vmul.f32 %v1070, 1.442695
      %v1096 = vpow.pop %v1095
      %v1097 = vmul.f32 %v1071, 1.442695
      %v1098 = vpow.pop %v1097
      %v1099 = vmul.f32 %v1072, 1.442695
      %v1100 = vpow.pop %v1099
      %v1101 = vmul.f32 %v1073, 1.442695
      %v1102 = vpow.pop %v1101
      %v1103 = vmul.f32 %v1074, 1.442695
      %v1104 = vpow.pop %v1103
      %v1105 = vmul.f32 %v1075, 1.442695
      %v1106 = vpow.pop %v1105
      %v1107 = vmul.f32 %v1076, 1.442695
      %v1108 = vpow.pop %v1107
      %1109 = vadd.xlane.f32.xlu0 %v1078
      %v1110 = vpop.xlane.xlu0 %1109
      %1111 = vadd.xlane.f32.xlu0 %v1080
      %v1112 = vpop.xlane.xlu0 %1111
      %1113 = vadd.xlane.f32.xlu0 %v1082
      %v1114 = vpop.xlane.xlu0 %1113
      %1115 = vadd.xlane.f32.xlu0 %v1084
      %v1116 = vpop.xlane.xlu0 %1115
      %1117 = vadd.xlane.f32.xlu0 %v1086
      %v1118 = vpop.xlane.xlu0 %1117
      %1119 = vadd.xlane.f32.xlu0 %v1088
      %v1120 = vpop.xlane.xlu0 %1119
      %1121 = vadd.xlane.f32.xlu0 %v1090
      %v1122 = vpop.xlane.xlu0 %1121
      %1123 = vadd.xlane.f32.xlu0 %v1092
      %v1124 = vpop.xlane.xlu0 %1123
      %1125 = vadd.xlane.f32.xlu0 %v1094
      %v1126 = vpop.xlane.xlu0 %1125
      %1127 = vadd.xlane.f32.xlu0 %v1096
      %v1128 = vpop.xlane.xlu0 %1127
      %1129 = vadd.xlane.f32.xlu0 %v1098
      %v1130 = vpop.xlane.xlu0 %1129
      %1131 = vadd.xlane.f32.xlu0 %v1100
      %v1132 = vpop.xlane.xlu0 %1131
      %1133 = vadd.xlane.f32.xlu0 %v1102
      %v1134 = vpop.xlane.xlu0 %1133
      %1135 = vadd.xlane.f32.xlu0 %v1104
      %v1136 = vpop.xlane.xlu0 %1135
      %1137 = vadd.xlane.f32.xlu0 %v1106
      %v1138 = vpop.xlane.xlu0 %1137
      %1139 = vadd.xlane.f32.xlu0 %v1108
      %v1140 = vpop.xlane.xlu0 %1139
      %v1141 = vrcp.pop %v1110
      %v1142 = vrcp.pop %v1112
      %v1143 = vrcp.pop %v1114
      %v1144 = vrcp.pop %v1116
      %v1145 = vrcp.pop %v1118
      %v1146 = vrcp.pop %v1120
      %v1147 = vrcp.pop %v1122
      %v1148 = vrcp.pop %v1124
      %v1149 = vrcp.pop %v1126
      %v1150 = vrcp.pop %v1128
      %v1151 = vrcp.pop %v1130
      %v1152 = vrcp.pop %v1132
      %v1153 = vrcp.pop %v1134
      %v1154 = vrcp.pop %v1136
      %v1155 = vrcp.pop %v1138
      %v1156 = vrcp.pop %v1140
      %v1157 = vmul.f32 %v1078, %v1141
      %v1158 = vmul.f32 %v1080, %v1142
      %v1159 = vmul.f32 %v1082, %v1143
      %v1160 = vmul.f32 %v1084, %v1144
      %v1161 = vmul.f32 %v1086, %v1145
      %v1162 = vmul.f32 %v1088, %v1146
      %v1163 = vmul.f32 %v1090, %v1147
      %v1164 = vmul.f32 %v1092, %v1148
      %v1165 = vmul.f32 %v1094, %v1149
      %v1166 = vmul.f32 %v1096, %v1150
      %v1167 = vmul.f32 %v1098, %v1151
      %v1168 = vmul.f32 %v1100, %v1152
      %v1169 = vmul.f32 %v1102, %v1153
      %v1170 = vmul.f32 %v1104, %v1154
      %v1171 = vmul.f32 %v1106, %v1155
      %v1172 = vmul.f32 %v1108, %v1156
      %1173 = vrot.lane.b32.xlu0 %v316, 56
      %v1174 = vpop.permute.xlu0 %1173
      %1175 = vrot.lane.b32.xlu0 %v319, 56
      %v1176 = vpop.permute.xlu0 %1175
      %1177 = vrot.lane.b32.xlu0 %v322, 56
      %v1178 = vpop.permute.xlu0 %1177
      %1179 = vrot.lane.b32.xlu0 %v325, 56
      %v1180 = vpop.permute.xlu0 %1179
      %1181 = vrot.lane.b32.xlu0 %v328, 56
      %v1182 = vpop.permute.xlu0 %1181
      %1183 = vrot.lane.b32.xlu0 %v331, 56
      %v1184 = vpop.permute.xlu0 %1183
      %1185 = vrot.lane.b32.xlu0 %v334, 56
      %v1186 = vpop.permute.xlu0 %1185
      %1187 = vrot.lane.b32.xlu0 %v337, 56
      %v1188 = vpop.permute.xlu0 %1187
      %1189 = vrot.lane.b32.xlu0 %v340, 56
      %v1190 = vpop.permute.xlu0 %1189
      %1191 = vrot.lane.b32.xlu0 %v343, 56
      %v1192 = vpop.permute.xlu0 %1191
      %1193 = vrot.lane.b32.xlu0 %v346, 56
      %v1194 = vpop.permute.xlu0 %1193
      %1195 = vrot.lane.b32.xlu0 %v349, 56
      %v1196 = vpop.permute.xlu0 %1195
      %1197 = vrot.lane.b32.xlu0 %v352, 56
      %v1198 = vpop.permute.xlu0 %1197
      %1199 = vrot.lane.b32.xlu0 %v355, 56
      %v1200 = vpop.permute.xlu0 %1199
      %1201 = vrot.lane.b32.xlu0 %v358, 56
      %v1202 = vpop.permute.xlu0 %1201
      %1203 = vrot.lane.b32.xlu0 %v361, 56
      %v1204 = vpop.permute.xlu0 %1203
      %1221 = vmatpush.msra.mxu0 %v1204
      %1222 = vmatpush.msra.mxu0 %v1202
      %1223 = vmatpush.msra.mxu0 %v1200
      %1224 = vmatpush.msra.mxu0 %v1198
      %1225 = vmatpush.msra.mxu0 %v1196
      %1226 = vmatpush.msra.mxu0 %v1194
      %1227 = vmatpush.msra.mxu0 %v1192
      %1228 = vmatpush.msra.mxu0 %v1190
      %1229 = vmatpush.msra.mxu0 %v1188
      %1230 = vmatpush.msra.mxu0 %v1186
      %1231 = vmatpush.msra.mxu0 %v1184
      %1232 = vmatpush.msra.mxu0 %v1182
      %1233 = vmatpush.msra.mxu0 %v1180
      %1234 = vmatpush.msra.mxu0 %v1178
      %1235 = vmatpush.msra.mxu0 %v1176
      %1236 = vmatpush.msra.mxu0 %v1174
      %1237 = vmatmul.f32.gmra.mxu0 %v1157
      %v1238 = vpop.f32.mrf.mxu0
      %v1239 = vadd.f32 0.0, %v1238
      %1240 = vmatmul.f32.gmra.mxu0 %v1158
      %v1241 = vpop.f32.mrf.mxu0
      %v1242 = vadd.f32 0.0, %v1241
      %1243 = vmatmul.f32.gmra.mxu0 %v1159
      %v1244 = vpop.f32.mrf.mxu0
      %v1245 = vadd.f32 0.0, %v1244
      %1246 = vmatmul.f32.gmra.mxu0 %v1160
      %v1247 = vpop.f32.mrf.mxu0
      %v1248 = vadd.f32 0.0, %v1247
      %1249 = vmatmul.f32.gmra.mxu0 %v1161
      %v1250 = vpop.f32.mrf.mxu0
      %v1251 = vadd.f32 0.0, %v1250
      %1252 = vmatmul.f32.gmra.mxu0 %v1162
      %v1253 = vpop.f32.mrf.mxu0
      %v1254 = vadd.f32 0.0, %v1253
      %1255 = vmatmul.f32.gmra.mxu0 %v1163
      %v1256 = vpop.f32.mrf.mxu0
      %v1257 = vadd.f32 0.0, %v1256
      %1258 = vmatmul.f32.gmra.mxu0 %v1164
      %v1259 = vpop.f32.mrf.mxu0
      %v1260 = vadd.f32 0.0, %v1259
      %1261 = vmatmul.f32.gmra.mxu0 %v1165
      %v1262 = vpop.f32.mrf.mxu0
      %v1263 = vadd.f32 0.0, %v1262
      %1264 = vmatmul.f32.gmra.mxu0 %v1166
      %v1265 = vpop.f32.mrf.mxu0
      %v1266 = vadd.f32 0.0, %v1265
      %1267 = vmatmul.f32.gmra.mxu0 %v1167
      %v1268 = vpop.f32.mrf.mxu0
      %v1269 = vadd.f32 0.0, %v1268
      %1270 = vmatmul.f32.gmra.mxu0 %v1168
      %v1271 = vpop.f32.mrf.mxu0
      %v1272 = vadd.f32 0.0, %v1271
      %1273 = vmatmul.f32.gmra.mxu0 %v1169
      %v1274 = vpop.f32.mrf.mxu0
      %v1275 = vadd.f32 0.0, %v1274
      %1276 = vmatmul.f32.gmra.mxu0 %v1170
      %v1277 = vpop.f32.mrf.mxu0
      %v1278 = vadd.f32 0.0, %v1277
      %1279 = vmatmul.f32.gmra.mxu0 %v1171
      %v1280 = vpop.f32.mrf.mxu0
      %v1281 = vadd.f32 0.0, %v1280
      %1282 = vmatmul.f32.gmra.mxu0 %v1172
      %v1283 = vpop.f32.mrf.mxu0
      %v1284 = vadd.f32 0.0, %v1283
      %1285 = vdwg.mxu0
      %v1286 = vld [vmem:[%s3 + $0x8] sm:$0xff]
      %v1288 = vsel %vm414, %v1239, 0
      %v1291 = vsel %vm414, %v1242, 0
      %v1294 = vsel %vm414, %v1245, 0
      %v1297 = vsel %vm414, %v1248, 0
      %v1300 = vsel %vm414, %v1251, 0
      %v1303 = vsel %vm414, %v1254, 0
      %v1306 = vsel %vm414, %v1257, 0
      %v1309 = vsel %vm414, %v1260, 0
      %v1312 = vsel %vm414, %v1263, 0
      %v1315 = vsel %vm414, %v1266, 0
      %v1318 = vsel %vm414, %v1269, 0
      %v1321 = vsel %vm414, %v1272, 0
      %v1324 = vsel %vm414, %v1275, 0
      %v1327 = vsel %vm414, %v1278, 0
      %v1330 = vsel %vm414, %v1281, 0
      %v1333 = vsel %vm414, %v1284, 0
      %1335 = vmatpush.msra.mxu0 0.0
      %1336 = vmatpush.msra.mxu0 0.0
      %1337 = vmatpush.msra.mxu0 0.0
      %1338 = vmatpush.msra.mxu0 0.0
      %1339 = vmatpush.msra.mxu0 0.0
      %1340 = vmatpush.msra.mxu0 0.0
      %1341 = vmatpush.msra.mxu0 0.0
      %1342 = vmatpush.msra.mxu0 0.0
      %1343 = vmatpush.msra.mxu0 0.0
      %1344 = vmatpush.msra.mxu0 0.0
      %1345 = vmatpush.msra.mxu0 0.0
      %1346 = vmatpush.msra.mxu0 0.0
      %1347 = vmatpush.msra.mxu0 0.0
      %1348 = vmatpush.msra.mxu0 0.0
      %1349 = vmatpush.msra.mxu0 0.0
      %1350 = vmatpush.msra.mxu0 %v1286
      %1351 = vmatmul.f32.gmra.mxu0 %v1288
      %v1352 = vpop.f32.mrf.mxu0
      %v1353 = vadd.f32 0.0, %v1352
      %1354 = vmatmul.f32.gmra.mxu0 %v1291
      %v1355 = vpop.f32.mrf.mxu0
      %v1356 = vadd.f32 0.0, %v1355
      %1357 = vmatmul.f32.gmra.mxu0 %v1294
      %v1358 = vpop.f32.mrf.mxu0
      %v1359 = vadd.f32 0.0, %v1358
      %1360 = vmatmul.f32.gmra.mxu0 %v1297
      %v1361 = vpop.f32.mrf.mxu0
      %v1362 = vadd.f32 0.0, %v1361
      %1363 = vmatmul.f32.gmra.mxu0 %v1300
      %v1364 = vpop.f32.mrf.mxu0
      %v1365 = vadd.f32 0.0, %v1364
      %1366 = vmatmul.f32.gmra.mxu0 %v1303
      %v1367 = vpop.f32.mrf.mxu0
      %v1368 = vadd.f32 0.0, %v1367
      %1369 = vmatmul.f32.gmra.mxu0 %v1306
      %v1370 = vpop.f32.mrf.mxu0
      %v1371 = vadd.f32 0.0, %v1370
      %1372 = vmatmul.f32.gmra.mxu0 %v1309
      %v1373 = vpop.f32.mrf.mxu0
      %v1374 = vadd.f32 0.0, %v1373
      %1375 = vmatmul.f32.gmra.mxu0 %v1312
      %v1376 = vpop.f32.mrf.mxu0
      %v1377 = vadd.f32 0.0, %v1376
      %1378 = vmatmul.f32.gmra.mxu0 %v1315
      %v1379 = vpop.f32.mrf.mxu0
      %v1380 = vadd.f32 0.0, %v1379
      %1381 = vmatmul.f32.gmra.mxu0 %v1318
      %v1382 = vpop.f32.mrf.mxu0
      %v1383 = vadd.f32 0.0, %v1382
      %1384 = vmatmul.f32.gmra.mxu0 %v1321
      %v1385 = vpop.f32.mrf.mxu0
      %v1386 = vadd.f32 0.0, %v1385
      %1387 = vmatmul.f32.gmra.mxu0 %v1324
      %v1388 = vpop.f32.mrf.mxu0
      %v1389 = vadd.f32 0.0, %v1388
      %1390 = vmatmul.f32.gmra.mxu0 %v1327
      %v1391 = vpop.f32.mrf.mxu0
      %v1392 = vadd.f32 0.0, %v1391
      %1393 = vmatmul.f32.gmra.mxu0 %v1330
      %v1394 = vpop.f32.mrf.mxu0
      %v1395 = vadd.f32 0.0, %v1394
      %1396 = vmatmul.f32.gmra.mxu0 %v1333
      %v1397 = vpop.f32.mrf.mxu0
      %v1398 = vadd.f32 0.0, %v1397
      %1399 = vdwg.mxu0
      %v1401 = vsel %vm414, %v772, 0
      %v1404 = vsel %vm414, %v775, 0
      %v1407 = vsel %vm414, %v778, 0
      %v1410 = vsel %vm414, %v781, 0
      %v1413 = vsel %vm414, %v784, 0
      %v1416 = vsel %vm414, %v787, 0
      %v1419 = vsel %vm414, %v790, 0
      %v1422 = vsel %vm414, %v793, 0
      %v1425 = vsel %vm414, %v796, 0
      %v1428 = vsel %vm414, %v799, 0
      %v1431 = vsel %vm414, %v802, 0
      %v1434 = vsel %vm414, %v805, 0
      %v1437 = vsel %vm414, %v808, 0
      %v1440 = vsel %vm414, %v811, 0
      %v1443 = vsel %vm414, %v814, 0
      %v1446 = vsel %vm414, %v817, 0
      %1448 = vmatpush.msra.mxu0 0.0
      %1449 = vmatpush.msra.mxu0 0.0
      %1450 = vmatpush.msra.mxu0 0.0
      %1451 = vmatpush.msra.mxu0 0.0
      %1452 = vmatpush.msra.mxu0 0.0
      %1453 = vmatpush.msra.mxu0 0.0
      %1454 = vmatpush.msra.mxu0 0.0
      %1455 = vmatpush.msra.mxu0 0.0
      %1456 = vmatpush.msra.mxu0 0.0
      %1457 = vmatpush.msra.mxu0 0.0
      %1458 = vmatpush.msra.mxu0 0.0
      %1459 = vmatpush.msra.mxu0 0.0
      %1460 = vmatpush.msra.mxu0 0.0
      %1461 = vmatpush.msra.mxu0 0.0
      %1462 = vmatpush.msra.mxu0 0.0
      %1463 = vmatpush.msra.mxu0 %v819
      %1464 = vmatmul.f32.gmra.mxu0 %v1401
      %v1465 = vpop.f32.mrf.mxu0
      %v1466 = vadd.f32 %v1353, %v1465
      %1467 = vmatmul.f32.gmra.mxu0 %v1404
      %v1468 = vpop.f32.mrf.mxu0
      %v1469 = vadd.f32 %v1356, %v1468
      %1470 = vmatmul.f32.gmra.mxu0 %v1407
      %v1471 = vpop.f32.mrf.mxu0
      %v1472 = vadd.f32 %v1359, %v1471
      %1473 = vmatmul.f32.gmra.mxu0 %v1410
      %v1474 = vpop.f32.mrf.mxu0
      %v1475 = vadd.f32 %v1362, %v1474
      %1476 = vmatmul.f32.gmra.mxu0 %v1413
      %v1477 = vpop.f32.mrf.mxu0
      %v1478 = vadd.f32 %v1365, %v1477
      %1479 = vmatmul.f32.gmra.mxu0 %v1416
      %v1480 = vpop.f32.mrf.mxu0
      %v1481 = vadd.f32 %v1368, %v1480
      %1482 = vmatmul.f32.gmra.mxu0 %v1419
      %v1483 = vpop.f32.mrf.mxu0
      %v1484 = vadd.f32 %v1371, %v1483
      %1485 = vmatmul.f32.gmra.mxu0 %v1422
      %v1486 = vpop.f32.mrf.mxu0
      %v1487 = vadd.f32 %v1374, %v1486
      %1488 = vmatmul.f32.gmra.mxu0 %v1425
      %v1489 = vpop.f32.mrf.mxu0
      %v1490 = vadd.f32 %v1377, %v1489
      %1491 = vmatmul.f32.gmra.mxu0 %v1428
      %v1492 = vpop.f32.mrf.mxu0
      %v1493 = vadd.f32 %v1380, %v1492
      %1494 = vmatmul.f32.gmra.mxu0 %v1431
      %v1495 = vpop.f32.mrf.mxu0
      %v1496 = vadd.f32 %v1383, %v1495
      %1497 = vmatmul.f32.gmra.mxu0 %v1434
      %v1498 = vpop.f32.mrf.mxu0
      %v1499 = vadd.f32 %v1386, %v1498
      %1500 = vmatmul.f32.gmra.mxu0 %v1437
      %v1501 = vpop.f32.mrf.mxu0
      %v1502 = vadd.f32 %v1389, %v1501
      %1503 = vmatmul.f32.gmra.mxu0 %v1440
      %v1504 = vpop.f32.mrf.mxu0
      %v1505 = vadd.f32 %v1392, %v1504
      %1506 = vmatmul.f32.gmra.mxu0 %v1443
      %v1507 = vpop.f32.mrf.mxu0
      %v1508 = vadd.f32 %v1395, %v1507
      %1509 = vmatmul.f32.gmra.mxu0 %v1446
      %v1510 = vpop.f32.mrf.mxu0
      %v1511 = vadd.f32 %v1398, %v1510
      %1512 = vdwg.mxu0
      %1513 = vrot.lane.b32.xlu0 %v316, 112
      %v1514 = vpop.permute.xlu0 %1513
      %1515 = vrot.lane.b32.xlu0 %v319, 112
      %v1516 = vpop.permute.xlu0 %1515
      %1517 = vrot.lane.b32.xlu0 %v322, 112
      %v1518 = vpop.permute.xlu0 %1517
      %1519 = vrot.lane.b32.xlu0 %v325, 112
      %v1520 = vpop.permute.xlu0 %1519
      %1521 = vrot.lane.b32.xlu0 %v328, 112
      %v1522 = vpop.permute.xlu0 %1521
      %1523 = vrot.lane.b32.xlu0 %v331, 112
      %v1524 = vpop.permute.xlu0 %1523
      %1525 = vrot.lane.b32.xlu0 %v334, 112
      %v1526 = vpop.permute.xlu0 %1525
      %1527 = vrot.lane.b32.xlu0 %v337, 112
      %v1528 = vpop.permute.xlu0 %1527
      %1529 = vrot.lane.b32.xlu0 %v340, 112
      %v1530 = vpop.permute.xlu0 %1529
      %1531 = vrot.lane.b32.xlu0 %v343, 112
      %v1532 = vpop.permute.xlu0 %1531
      %1533 = vrot.lane.b32.xlu0 %v346, 112
      %v1534 = vpop.permute.xlu0 %1533
      %1535 = vrot.lane.b32.xlu0 %v349, 112
      %v1536 = vpop.permute.xlu0 %1535
      %1537 = vrot.lane.b32.xlu0 %v352, 112
      %v1538 = vpop.permute.xlu0 %1537
      %1539 = vrot.lane.b32.xlu0 %v355, 112
      %v1540 = vpop.permute.xlu0 %1539
      %1541 = vrot.lane.b32.xlu0 %v358, 112
      %v1542 = vpop.permute.xlu0 %1541
      %1543 = vrot.lane.b32.xlu0 %v361, 112
      %v1544 = vpop.permute.xlu0 %1543
      %1545 = vrot.lane.b32.xlu0 %v316, 80
      %v1546 = vpop.permute.xlu0 %1545
      %1547 = vrot.lane.b32.xlu0 %v319, 80
      %v1548 = vpop.permute.xlu0 %1547
      %1549 = vrot.lane.b32.xlu0 %v322, 80
      %v1550 = vpop.permute.xlu0 %1549
      %1551 = vrot.lane.b32.xlu0 %v325, 80
      %v1552 = vpop.permute.xlu0 %1551
      %1553 = vrot.lane.b32.xlu0 %v328, 80
      %v1554 = vpop.permute.xlu0 %1553
      %1555 = vrot.lane.b32.xlu0 %v331, 80
      %v1556 = vpop.permute.xlu0 %1555
      %1557 = vrot.lane.b32.xlu0 %v334, 80
      %v1558 = vpop.permute.xlu0 %1557
      %1559 = vrot.lane.b32.xlu0 %v337, 80
      %v1560 = vpop.permute.xlu0 %1559
      %1561 = vrot.lane.b32.xlu0 %v340, 80
      %v1562 = vpop.permute.xlu0 %1561
      %1563 = vrot.lane.b32.xlu0 %v343, 80
      %v1564 = vpop.permute.xlu0 %1563
      %1565 = vrot.lane.b32.xlu0 %v346, 80
      %v1566 = vpop.permute.xlu0 %1565
      %1567 = vrot.lane.b32.xlu0 %v349, 80
      %v1568 = vpop.permute.xlu0 %1567
      %1569 = vrot.lane.b32.xlu0 %v352, 80
      %v1570 = vpop.permute.xlu0 %1569
      %1571 = vrot.lane.b32.xlu0 %v355, 80
      %v1572 = vpop.permute.xlu0 %1571
      %1573 = vrot.lane.b32.xlu0 %v358, 80
      %v1574 = vpop.permute.xlu0 %1573
      %1575 = vrot.lane.b32.xlu0 %v361, 80
      %v1576 = vpop.permute.xlu0 %1575
      %v1577 = vsel %vm414, %v1514, 0
      %v1579 = vsel %vm414, %v1516, 0
      %v1581 = vsel %vm414, %v1518, 0
      %v1583 = vsel %vm414, %v1520, 0
      %v1585 = vsel %vm414, %v1522, 0
      %v1587 = vsel %vm414, %v1524, 0
      %v1589 = vsel %vm414, %v1526, 0
      %v1591 = vsel %vm414, %v1528, 0
      %v1593 = vsel %vm414, %v1530, 0
      %v1595 = vsel %vm414, %v1532, 0
      %v1597 = vsel %vm414, %v1534, 0
      %v1599 = vsel %vm414, %v1536, 0
      %v1601 = vsel %vm414, %v1538, 0
      %v1603 = vsel %vm414, %v1540, 0
      %v1605 = vsel %vm414, %v1542, 0
      %v1607 = vsel %vm414, %v1544, 0
      %v1609 = vsel %vm414, %v1546, 0
      %v1611 = vsel %vm414, %v1548, 0
      %v1613 = vsel %vm414, %v1550, 0
      %v1615 = vsel %vm414, %v1552, 0
      %v1617 = vsel %vm414, %v1554, 0
      %v1619 = vsel %vm414, %v1556, 0
      %v1621 = vsel %vm414, %v1558, 0
      %v1623 = vsel %vm414, %v1560, 0
      %v1625 = vsel %vm414, %v1562, 0
      %v1627 = vsel %vm414, %v1564, 0
      %v1629 = vsel %vm414, %v1566, 0
      %v1631 = vsel %vm414, %v1568, 0
      %v1633 = vsel %vm414, %v1570, 0
      %v1635 = vsel %vm414, %v1572, 0
      %v1637 = vsel %vm414, %v1574, 0
      %v1639 = vsel %vm414, %v1576, 0
      %1641 = vmatpush.xpose.msra.mxu0 %v1639
      %1642 = vmatpush.xpose.msra.mxu0 %v1637
      %1643 = vmatpush.xpose.msra.mxu0 %v1635
      %1644 = vmatpush.xpose.msra.mxu0 %v1633
      %1645 = vmatpush.xpose.msra.mxu0 %v1631
      %1646 = vmatpush.xpose.msra.mxu0 %v1629
      %1647 = vmatpush.xpose.msra.mxu0 %v1627
      %1648 = vmatpush.xpose.msra.mxu0 %v1625
      %1649 = vmatpush.xpose.msra.mxu0 %v1623
      %1650 = vmatpush.xpose.msra.mxu0 %v1621
      %1651 = vmatpush.xpose.msra.mxu0 %v1619
      %1652 = vmatpush.xpose.msra.mxu0 %v1617
      %1653 = vmatpush.xpose.msra.mxu0 %v1615
      %1654 = vmatpush.xpose.msra.mxu0 %v1613
      %1655 = vmatpush.xpose.msra.mxu0 %v1611
      %1656 = vmatpush.xpose.msra.mxu0 %v1609
      %1657 = vmatmul.f32.gmra.mxu0 %v1577
      %v1658 = vpop.f32.mrf.mxu0
      %v1659 = vadd.f32 0.0, %v1658
      %1660 = vmatmul.f32.gmra.mxu0 %v1579
      %v1661 = vpop.f32.mrf.mxu0
      %v1662 = vadd.f32 0.0, %v1661
      %1663 = vmatmul.f32.gmra.mxu0 %v1581
      %v1664 = vpop.f32.mrf.mxu0
      %v1665 = vadd.f32 0.0, %v1664
      %1666 = vmatmul.f32.gmra.mxu0 %v1583
      %v1667 = vpop.f32.mrf.mxu0
      %v1668 = vadd.f32 0.0, %v1667
      %1669 = vmatmul.f32.gmra.mxu0 %v1585
      %v1670 = vpop.f32.mrf.mxu0
      %v1671 = vadd.f32 0.0, %v1670
      %1672 = vmatmul.f32.gmra.mxu0 %v1587
      %v1673 = vpop.f32.mrf.mxu0
      %v1674 = vadd.f32 0.0, %v1673
      %1675 = vmatmul.f32.gmra.mxu0 %v1589
      %v1676 = vpop.f32.mrf.mxu0
      %v1677 = vadd.f32 0.0, %v1676
      %1678 = vmatmul.f32.gmra.mxu0 %v1591
      %v1679 = vpop.f32.mrf.mxu0
      %v1680 = vadd.f32 0.0, %v1679
      %1681 = vmatmul.f32.gmra.mxu0 %v1593
      %v1682 = vpop.f32.mrf.mxu0
      %v1683 = vadd.f32 0.0, %v1682
      %1684 = vmatmul.f32.gmra.mxu0 %v1595
      %v1685 = vpop.f32.mrf.mxu0
      %v1686 = vadd.f32 0.0, %v1685
      %1687 = vmatmul.f32.gmra.mxu0 %v1597
      %v1688 = vpop.f32.mrf.mxu0
      %v1689 = vadd.f32 0.0, %v1688
      %1690 = vmatmul.f32.gmra.mxu0 %v1599
      %v1691 = vpop.f32.mrf.mxu0
      %v1692 = vadd.f32 0.0, %v1691
      %1693 = vmatmul.f32.gmra.mxu0 %v1601
      %v1694 = vpop.f32.mrf.mxu0
      %v1695 = vadd.f32 0.0, %v1694
      %1696 = vmatmul.f32.gmra.mxu0 %v1603
      %v1697 = vpop.f32.mrf.mxu0
      %v1698 = vadd.f32 0.0, %v1697
      %1699 = vmatmul.f32.gmra.mxu0 %v1605
      %v1700 = vpop.f32.mrf.mxu0
      %v1701 = vadd.f32 0.0, %v1700
      %1702 = vmatmul.f32.gmra.mxu0 %v1607
      %v1703 = vpop.f32.mrf.mxu0
      %v1704 = vadd.f32 0.0, %v1703
      %1705 = vdwg.mxu0
      %v1706 = vsel %vm545, %v1659, -1e+30
      %v1707 = vsel %vm545, %v1662, -1e+30
      %v1708 = vsel %vm545, %v1665, -1e+30
      %v1709 = vsel %vm545, %v1668, -1e+30
      %v1710 = vsel %vm545, %v1671, -1e+30
      %v1711 = vsel %vm545, %v1674, -1e+30
      %v1712 = vsel %vm545, %v1677, -1e+30
      %v1713 = vsel %vm545, %v1680, -1e+30
      %v1714 = vsel %vm545, %v1683, -1e+30
      %v1715 = vsel %vm545, %v1686, -1e+30
      %v1716 = vsel %vm545, %v1689, -1e+30
      %v1717 = vsel %vm545, %v1692, -1e+30
      %v1718 = vsel %vm545, %v1695, -1e+30
      %v1719 = vsel %vm545, %v1698, -1e+30
      %v1720 = vsel %vm545, %v1701, -1e+30
      %v1721 = vsel %vm545, %v1704, -1e+30
      %1722 = vmax.xlane.f32.xlu0 %v1706
      %v1723 = vpop.xlane.xlu0 %1722
      %1724 = vmax.xlane.f32.xlu0 %v1707
      %v1725 = vpop.xlane.xlu0 %1724
      %1726 = vmax.xlane.f32.xlu0 %v1708
      %v1727 = vpop.xlane.xlu0 %1726
      %1728 = vmax.xlane.f32.xlu0 %v1709
      %v1729 = vpop.xlane.xlu0 %1728
      %1730 = vmax.xlane.f32.xlu0 %v1710
      %v1731 = vpop.xlane.xlu0 %1730
      %1732 = vmax.xlane.f32.xlu0 %v1711
      %v1733 = vpop.xlane.xlu0 %1732
      %1734 = vmax.xlane.f32.xlu0 %v1712
      %v1735 = vpop.xlane.xlu0 %1734
      %1736 = vmax.xlane.f32.xlu0 %v1713
      %v1737 = vpop.xlane.xlu0 %1736
      %1738 = vmax.xlane.f32.xlu0 %v1714
      %v1739 = vpop.xlane.xlu0 %1738
      %1740 = vmax.xlane.f32.xlu0 %v1715
      %v1741 = vpop.xlane.xlu0 %1740
      %1742 = vmax.xlane.f32.xlu0 %v1716
      %v1743 = vpop.xlane.xlu0 %1742
      %1744 = vmax.xlane.f32.xlu0 %v1717
      %v1745 = vpop.xlane.xlu0 %1744
      %1746 = vmax.xlane.f32.xlu0 %v1718
      %v1747 = vpop.xlane.xlu0 %1746
      %1748 = vmax.xlane.f32.xlu0 %v1719
      %v1749 = vpop.xlane.xlu0 %1748
      %1750 = vmax.xlane.f32.xlu0 %v1720
      %v1751 = vpop.xlane.xlu0 %1750
      %1752 = vmax.xlane.f32.xlu0 %v1721
      %v1753 = vpop.xlane.xlu0 %1752
      %v1754 = vsub.f32 %v1706, %v1723
      %v1755 = vsub.f32 %v1707, %v1725
      %v1756 = vsub.f32 %v1708, %v1727
      %v1757 = vsub.f32 %v1709, %v1729
      %v1758 = vsub.f32 %v1710, %v1731
      %v1759 = vsub.f32 %v1711, %v1733
      %v1760 = vsub.f32 %v1712, %v1735
      %v1761 = vsub.f32 %v1713, %v1737
      %v1762 = vsub.f32 %v1714, %v1739
      %v1763 = vsub.f32 %v1715, %v1741
      %v1764 = vsub.f32 %v1716, %v1743
      %v1765 = vsub.f32 %v1717, %v1745
      %v1766 = vsub.f32 %v1718, %v1747
      %v1767 = vsub.f32 %v1719, %v1749
      %v1768 = vsub.f32 %v1720, %v1751
      %v1769 = vsub.f32 %v1721, %v1753
      %v1770 = vmul.f32 %v1754, 1.442695
      %v1771 = vpow.pop %v1770
      %v1772 = vmul.f32 %v1755, 1.442695
      %v1773 = vpow.pop %v1772
      %v1774 = vmul.f32 %v1756, 1.442695
      %v1775 = vpow.pop %v1774
      %v1776 = vmul.f32 %v1757, 1.442695
      %v1777 = vpow.pop %v1776
      %v1778 = vmul.f32 %v1758, 1.442695
      %v1779 = vpow.pop %v1778
      %v1780 = vmul.f32 %v1759, 1.442695
      %v1781 = vpow.pop %v1780
      %v1782 = vmul.f32 %v1760, 1.442695
      %v1783 = vpow.pop %v1782
      %v1784 = vmul.f32 %v1761, 1.442695
      %v1785 = vpow.pop %v1784
      %v1786 = vmul.f32 %v1762, 1.442695
      %v1787 = vpow.pop %v1786
      %v1788 = vmul.f32 %v1763, 1.442695
      %v1789 = vpow.pop %v1788
      %v1790 = vmul.f32 %v1764, 1.442695
      %v1791 = vpow.pop %v1790
      %v1792 = vmul.f32 %v1765, 1.442695
      %v1793 = vpow.pop %v1792
      %v1794 = vmul.f32 %v1766, 1.442695
      %v1795 = vpow.pop %v1794
      %v1796 = vmul.f32 %v1767, 1.442695
      %v1797 = vpow.pop %v1796
      %v1798 = vmul.f32 %v1768, 1.442695
      %v1799 = vpow.pop %v1798
      %v1800 = vmul.f32 %v1769, 1.442695
      %v1801 = vpow.pop %v1800
      %1802 = vadd.xlane.f32.xlu0 %v1771
      %v1803 = vpop.xlane.xlu0 %1802
      %1804 = vadd.xlane.f32.xlu0 %v1773
      %v1805 = vpop.xlane.xlu0 %1804
      %1806 = vadd.xlane.f32.xlu0 %v1775
      %v1807 = vpop.xlane.xlu0 %1806
      %1808 = vadd.xlane.f32.xlu0 %v1777
      %v1809 = vpop.xlane.xlu0 %1808
      %1810 = vadd.xlane.f32.xlu0 %v1779
      %v1811 = vpop.xlane.xlu0 %1810
      %1812 = vadd.xlane.f32.xlu0 %v1781
      %v1813 = vpop.xlane.xlu0 %1812
      %1814 = vadd.xlane.f32.xlu0 %v1783
      %v1815 = vpop.xlane.xlu0 %1814
      %1816 = vadd.xlane.f32.xlu0 %v1785
      %v1817 = vpop.xlane.xlu0 %1816
      %1818 = vadd.xlane.f32.xlu0 %v1787
      %v1819 = vpop.xlane.xlu0 %1818
      %1820 = vadd.xlane.f32.xlu0 %v1789
      %v1821 = vpop.xlane.xlu0 %1820
      %1822 = vadd.xlane.f32.xlu0 %v1791
      %v1823 = vpop.xlane.xlu0 %1822
      %1824 = vadd.xlane.f32.xlu0 %v1793
      %v1825 = vpop.xlane.xlu0 %1824
      %1826 = vadd.xlane.f32.xlu0 %v1795
      %v1827 = vpop.xlane.xlu0 %1826
      %1828 = vadd.xlane.f32.xlu0 %v1797
      %v1829 = vpop.xlane.xlu0 %1828
      %1830 = vadd.xlane.f32.xlu0 %v1799
      %v1831 = vpop.xlane.xlu0 %1830
      %1832 = vadd.xlane.f32.xlu0 %v1801
      %v1833 = vpop.xlane.xlu0 %1832
      %v1834 = vrcp.pop %v1803
      %v1835 = vrcp.pop %v1805
      %v1836 = vrcp.pop %v1807
      %v1837 = vrcp.pop %v1809
      %v1838 = vrcp.pop %v1811
      %v1839 = vrcp.pop %v1813
      %v1840 = vrcp.pop %v1815
      %v1841 = vrcp.pop %v1817
      %v1842 = vrcp.pop %v1819
      %v1843 = vrcp.pop %v1821
      %v1844 = vrcp.pop %v1823
      %v1845 = vrcp.pop %v1825
      %v1846 = vrcp.pop %v1827
      %v1847 = vrcp.pop %v1829
      %v1848 = vrcp.pop %v1831
      %v1849 = vrcp.pop %v1833
      %v1850 = vmul.f32 %v1771, %v1834
      %v1851 = vmul.f32 %v1773, %v1835
      %v1852 = vmul.f32 %v1775, %v1836
      %v1853 = vmul.f32 %v1777, %v1837
      %v1854 = vmul.f32 %v1779, %v1838
      %v1855 = vmul.f32 %v1781, %v1839
      %v1856 = vmul.f32 %v1783, %v1840
      %v1857 = vmul.f32 %v1785, %v1841
      %v1858 = vmul.f32 %v1787, %v1842
      %v1859 = vmul.f32 %v1789, %v1843
      %v1860 = vmul.f32 %v1791, %v1844
      %v1861 = vmul.f32 %v1793, %v1845
      %v1862 = vmul.f32 %v1795, %v1846
      %v1863 = vmul.f32 %v1797, %v1847
      %v1864 = vmul.f32 %v1799, %v1848
      %v1865 = vmul.f32 %v1801, %v1849
      %1866 = vrot.lane.b32.xlu0 %v316, 48
      %v1867 = vpop.permute.xlu0 %1866
      %1868 = vrot.lane.b32.xlu0 %v319, 48
      %v1869 = vpop.permute.xlu0 %1868
      %1870 = vrot.lane.b32.xlu0 %v322, 48
      %v1871 = vpop.permute.xlu0 %1870
      %1872 = vrot.lane.b32.xlu0 %v325, 48
      %v1873 = vpop.permute.xlu0 %1872
      %1874 = vrot.lane.b32.xlu0 %v328, 48
      %v1875 = vpop.permute.xlu0 %1874
      %1876 = vrot.lane.b32.xlu0 %v331, 48
      %v1877 = vpop.permute.xlu0 %1876
      %1878 = vrot.lane.b32.xlu0 %v334, 48
      %v1879 = vpop.permute.xlu0 %1878
      %1880 = vrot.lane.b32.xlu0 %v337, 48
      %v1881 = vpop.permute.xlu0 %1880
      %1882 = vrot.lane.b32.xlu0 %v340, 48
      %v1883 = vpop.permute.xlu0 %1882
      %1884 = vrot.lane.b32.xlu0 %v343, 48
      %v1885 = vpop.permute.xlu0 %1884
      %1886 = vrot.lane.b32.xlu0 %v346, 48
      %v1887 = vpop.permute.xlu0 %1886
      %1888 = vrot.lane.b32.xlu0 %v349, 48
      %v1889 = vpop.permute.xlu0 %1888
      %1890 = vrot.lane.b32.xlu0 %v352, 48
      %v1891 = vpop.permute.xlu0 %1890
      %1892 = vrot.lane.b32.xlu0 %v355, 48
      %v1893 = vpop.permute.xlu0 %1892
      %1894 = vrot.lane.b32.xlu0 %v358, 48
      %v1895 = vpop.permute.xlu0 %1894
      %1896 = vrot.lane.b32.xlu0 %v361, 48
      %v1897 = vpop.permute.xlu0 %1896
      %1914 = vmatpush.msra.mxu0 %v1897
      %1915 = vmatpush.msra.mxu0 %v1895
      %1916 = vmatpush.msra.mxu0 %v1893
      %1917 = vmatpush.msra.mxu0 %v1891
      %1918 = vmatpush.msra.mxu0 %v1889
      %1919 = vmatpush.msra.mxu0 %v1887
      %1920 = vmatpush.msra.mxu0 %v1885
      %1921 = vmatpush.msra.mxu0 %v1883
      %1922 = vmatpush.msra.mxu0 %v1881
      %1923 = vmatpush.msra.mxu0 %v1879
      %1924 = vmatpush.msra.mxu0 %v1877
      %1925 = vmatpush.msra.mxu0 %v1875
      %1926 = vmatpush.msra.mxu0 %v1873
      %1927 = vmatpush.msra.mxu0 %v1871
      %1928 = vmatpush.msra.mxu0 %v1869
      %1929 = vmatpush.msra.mxu0 %v1867
      %1930 = vmatmul.f32.gmra.mxu0 %v1850
      %v1931 = vpop.f32.mrf.mxu0
      %v1932 = vadd.f32 0.0, %v1931
      %1933 = vmatmul.f32.gmra.mxu0 %v1851
      %v1934 = vpop.f32.mrf.mxu0
      %v1935 = vadd.f32 0.0, %v1934
      %1936 = vmatmul.f32.gmra.mxu0 %v1852
      %v1937 = vpop.f32.mrf.mxu0
      %v1938 = vadd.f32 0.0, %v1937
      %1939 = vmatmul.f32.gmra.mxu0 %v1853
      %v1940 = vpop.f32.mrf.mxu0
      %v1941 = vadd.f32 0.0, %v1940
      %1942 = vmatmul.f32.gmra.mxu0 %v1854
      %v1943 = vpop.f32.mrf.mxu0
      %v1944 = vadd.f32 0.0, %v1943
      %1945 = vmatmul.f32.gmra.mxu0 %v1855
      %v1946 = vpop.f32.mrf.mxu0
      %v1947 = vadd.f32 0.0, %v1946
      %1948 = vmatmul.f32.gmra.mxu0 %v1856
      %v1949 = vpop.f32.mrf.mxu0
      %v1950 = vadd.f32 0.0, %v1949
      %1951 = vmatmul.f32.gmra.mxu0 %v1857
      %v1952 = vpop.f32.mrf.mxu0
      %v1953 = vadd.f32 0.0, %v1952
      %1954 = vmatmul.f32.gmra.mxu0 %v1858
      %v1955 = vpop.f32.mrf.mxu0
      %v1956 = vadd.f32 0.0, %v1955
      %1957 = vmatmul.f32.gmra.mxu0 %v1859
      %v1958 = vpop.f32.mrf.mxu0
      %v1959 = vadd.f32 0.0, %v1958
      %1960 = vmatmul.f32.gmra.mxu0 %v1860
      %v1961 = vpop.f32.mrf.mxu0
      %v1962 = vadd.f32 0.0, %v1961
      %1963 = vmatmul.f32.gmra.mxu0 %v1861
      %v1964 = vpop.f32.mrf.mxu0
      %v1965 = vadd.f32 0.0, %v1964
      %1966 = vmatmul.f32.gmra.mxu0 %v1862
      %v1967 = vpop.f32.mrf.mxu0
      %v1968 = vadd.f32 0.0, %v1967
      %1969 = vmatmul.f32.gmra.mxu0 %v1863
      %v1970 = vpop.f32.mrf.mxu0
      %v1971 = vadd.f32 0.0, %v1970
      %1972 = vmatmul.f32.gmra.mxu0 %v1864
      %v1973 = vpop.f32.mrf.mxu0
      %v1974 = vadd.f32 0.0, %v1973
      %1975 = vmatmul.f32.gmra.mxu0 %v1865
      %v1976 = vpop.f32.mrf.mxu0
      %v1977 = vadd.f32 0.0, %v1976
      %1978 = vdwg.mxu0
      %v1979 = vld [vmem:[%s3 + $0x10] sm:$0xff]
      %v1981 = vsel %vm414, %v1932, 0
      %v1984 = vsel %vm414, %v1935, 0
      %v1987 = vsel %vm414, %v1938, 0
      %v1990 = vsel %vm414, %v1941, 0
      %v1993 = vsel %vm414, %v1944, 0
      %v1996 = vsel %vm414, %v1947, 0
      %v1999 = vsel %vm414, %v1950, 0
      %v2002 = vsel %vm414, %v1953, 0
      %v2005 = vsel %vm414, %v1956, 0
      %v2008 = vsel %vm414, %v1959, 0
      %v2011 = vsel %vm414, %v1962, 0
      %v2014 = vsel %vm414, %v1965, 0
      %v2017 = vsel %vm414, %v1968, 0
      %v2020 = vsel %vm414, %v1971, 0
      %v2023 = vsel %vm414, %v1974, 0
      %v2026 = vsel %vm414, %v1977, 0
      %2028 = vmatpush.msra.mxu0 0.0
      %2029 = vmatpush.msra.mxu0 0.0
      %2030 = vmatpush.msra.mxu0 0.0
      %2031 = vmatpush.msra.mxu0 0.0
      %2032 = vmatpush.msra.mxu0 0.0
      %2033 = vmatpush.msra.mxu0 0.0
      %2034 = vmatpush.msra.mxu0 0.0
      %2035 = vmatpush.msra.mxu0 0.0
      %2036 = vmatpush.msra.mxu0 0.0
      %2037 = vmatpush.msra.mxu0 0.0
      %2038 = vmatpush.msra.mxu0 0.0
      %2039 = vmatpush.msra.mxu0 0.0
      %2040 = vmatpush.msra.mxu0 0.0
      %2041 = vmatpush.msra.mxu0 0.0
      %2042 = vmatpush.msra.mxu0 0.0
      %2043 = vmatpush.msra.mxu0 %v1979
      %2044 = vmatmul.f32.gmra.mxu0 %v1981
      %v2045 = vpop.f32.mrf.mxu0
      %v2046 = vadd.f32 0.0, %v2045
      %2047 = vmatmul.f32.gmra.mxu0 %v1984
      %v2048 = vpop.f32.mrf.mxu0
      %v2049 = vadd.f32 0.0, %v2048
      %2050 = vmatmul.f32.gmra.mxu0 %v1987
      %v2051 = vpop.f32.mrf.mxu0
      %v2052 = vadd.f32 0.0, %v2051
      %2053 = vmatmul.f32.gmra.mxu0 %v1990
      %v2054 = vpop.f32.mrf.mxu0
      %v2055 = vadd.f32 0.0, %v2054
      %2056 = vmatmul.f32.gmra.mxu0 %v1993
      %v2057 = vpop.f32.mrf.mxu0
      %v2058 = vadd.f32 0.0, %v2057
      %2059 = vmatmul.f32.gmra.mxu0 %v1996
      %v2060 = vpop.f32.mrf.mxu0
      %v2061 = vadd.f32 0.0, %v2060
      %2062 = vmatmul.f32.gmra.mxu0 %v1999
      %v2063 = vpop.f32.mrf.mxu0
      %v2064 = vadd.f32 0.0, %v2063
      %2065 = vmatmul.f32.gmra.mxu0 %v2002
      %v2066 = vpop.f32.mrf.mxu0
      %v2067 = vadd.f32 0.0, %v2066
      %2068 = vmatmul.f32.gmra.mxu0 %v2005
      %v2069 = vpop.f32.mrf.mxu0
      %v2070 = vadd.f32 0.0, %v2069
      %2071 = vmatmul.f32.gmra.mxu0 %v2008
      %v2072 = vpop.f32.mrf.mxu0
      %v2073 = vadd.f32 0.0, %v2072
      %2074 = vmatmul.f32.gmra.mxu0 %v2011
      %v2075 = vpop.f32.mrf.mxu0
      %v2076 = vadd.f32 0.0, %v2075
      %2077 = vmatmul.f32.gmra.mxu0 %v2014
      %v2078 = vpop.f32.mrf.mxu0
      %v2079 = vadd.f32 0.0, %v2078
      %2080 = vmatmul.f32.gmra.mxu0 %v2017
      %v2081 = vpop.f32.mrf.mxu0
      %v2082 = vadd.f32 0.0, %v2081
      %2083 = vmatmul.f32.gmra.mxu0 %v2020
      %v2084 = vpop.f32.mrf.mxu0
      %v2085 = vadd.f32 0.0, %v2084
      %2086 = vmatmul.f32.gmra.mxu0 %v2023
      %v2087 = vpop.f32.mrf.mxu0
      %v2088 = vadd.f32 0.0, %v2087
      %2089 = vmatmul.f32.gmra.mxu0 %v2026
      %v2090 = vpop.f32.mrf.mxu0
      %v2091 = vadd.f32 0.0, %v2090
      %2092 = vdwg.mxu0
      %v2093 = vadd.f32 %v1466, %v2046
      %v2094 = vadd.f32 %v1469, %v2049
      %v2095 = vadd.f32 %v1472, %v2052
      %v2096 = vadd.f32 %v1475, %v2055
      %v2097 = vadd.f32 %v1478, %v2058
      %v2098 = vadd.f32 %v1481, %v2061
      %v2099 = vadd.f32 %v1484, %v2064
      %v2100 = vadd.f32 %v1487, %v2067
      %v2101 = vadd.f32 %v1490, %v2070
      %v2102 = vadd.f32 %v1493, %v2073
      %v2103 = vadd.f32 %v1496, %v2076
      %v2104 = vadd.f32 %v1499, %v2079
      %v2105 = vadd.f32 %v1502, %v2082
      %v2106 = vadd.f32 %v1505, %v2085
      %v2107 = vadd.f32 %v1508, %v2088
      %v2108 = vadd.f32 %v1511, %v2091
      %2109 = vrot.lane.b32.xlu0 %v316, 104
      %v2110 = vpop.permute.xlu0 %2109
      %2111 = vrot.lane.b32.xlu0 %v319, 104
      %v2112 = vpop.permute.xlu0 %2111
      %2113 = vrot.lane.b32.xlu0 %v322, 104
      %v2114 = vpop.permute.xlu0 %2113
      %2115 = vrot.lane.b32.xlu0 %v325, 104
      %v2116 = vpop.permute.xlu0 %2115
      %2117 = vrot.lane.b32.xlu0 %v328, 104
      %v2118 = vpop.permute.xlu0 %2117
      %2119 = vrot.lane.b32.xlu0 %v331, 104
      %v2120 = vpop.permute.xlu0 %2119
      %2121 = vrot.lane.b32.xlu0 %v334, 104
      %v2122 = vpop.permute.xlu0 %2121
      %2123 = vrot.lane.b32.xlu0 %v337, 104
      %v2124 = vpop.permute.xlu0 %2123
      %2125 = vrot.lane.b32.xlu0 %v340, 104
      %v2126 = vpop.permute.xlu0 %2125
      %2127 = vrot.lane.b32.xlu0 %v343, 104
      %v2128 = vpop.permute.xlu0 %2127
      %2129 = vrot.lane.b32.xlu0 %v346, 104
      %v2130 = vpop.permute.xlu0 %2129
      %2131 = vrot.lane.b32.xlu0 %v349, 104
      %v2132 = vpop.permute.xlu0 %2131
      %2133 = vrot.lane.b32.xlu0 %v352, 104
      %v2134 = vpop.permute.xlu0 %2133
      %2135 = vrot.lane.b32.xlu0 %v355, 104
      %v2136 = vpop.permute.xlu0 %2135
      %2137 = vrot.lane.b32.xlu0 %v358, 104
      %v2138 = vpop.permute.xlu0 %2137
      %2139 = vrot.lane.b32.xlu0 %v361, 104
      %v2140 = vpop.permute.xlu0 %2139
      %2141 = vrot.lane.b32.xlu0 %v316, 72
      %v2142 = vpop.permute.xlu0 %2141
      %2143 = vrot.lane.b32.xlu0 %v319, 72
      %v2144 = vpop.permute.xlu0 %2143
      %2145 = vrot.lane.b32.xlu0 %v322, 72
      %v2146 = vpop.permute.xlu0 %2145
      %2147 = vrot.lane.b32.xlu0 %v325, 72
      %v2148 = vpop.permute.xlu0 %2147
      %2149 = vrot.lane.b32.xlu0 %v328, 72
      %v2150 = vpop.permute.xlu0 %2149
      %2151 = vrot.lane.b32.xlu0 %v331, 72
      %v2152 = vpop.permute.xlu0 %2151
      %2153 = vrot.lane.b32.xlu0 %v334, 72
      %v2154 = vpop.permute.xlu0 %2153
      %2155 = vrot.lane.b32.xlu0 %v337, 72
      %v2156 = vpop.permute.xlu0 %2155
      %2157 = vrot.lane.b32.xlu0 %v340, 72
      %v2158 = vpop.permute.xlu0 %2157
      %2159 = vrot.lane.b32.xlu0 %v343, 72
      %v2160 = vpop.permute.xlu0 %2159
      %2161 = vrot.lane.b32.xlu0 %v346, 72
      %v2162 = vpop.permute.xlu0 %2161
      %2163 = vrot.lane.b32.xlu0 %v349, 72
      %v2164 = vpop.permute.xlu0 %2163
      %2165 = vrot.lane.b32.xlu0 %v352, 72
      %v2166 = vpop.permute.xlu0 %2165
      %2167 = vrot.lane.b32.xlu0 %v355, 72
      %v2168 = vpop.permute.xlu0 %2167
      %2169 = vrot.lane.b32.xlu0 %v358, 72
      %v2170 = vpop.permute.xlu0 %2169
      %2171 = vrot.lane.b32.xlu0 %v361, 72
      %v2172 = vpop.permute.xlu0 %2171
      %v2173 = vsel %vm414, %v2110, 0
      %v2175 = vsel %vm414, %v2112, 0
      %v2177 = vsel %vm414, %v2114, 0
      %v2179 = vsel %vm414, %v2116, 0
      %v2181 = vsel %vm414, %v2118, 0
      %v2183 = vsel %vm414, %v2120, 0
      %v2185 = vsel %vm414, %v2122, 0
      %v2187 = vsel %vm414, %v2124, 0
      %v2189 = vsel %vm414, %v2126, 0
      %v2191 = vsel %vm414, %v2128, 0
      %v2193 = vsel %vm414, %v2130, 0
      %v2195 = vsel %vm414, %v2132, 0
      %v2197 = vsel %vm414, %v2134, 0
      %v2199 = vsel %vm414, %v2136, 0
      %v2201 = vsel %vm414, %v2138, 0
      %v2203 = vsel %vm414, %v2140, 0
      %v2205 = vsel %vm414, %v2142, 0
      %v2207 = vsel %vm414, %v2144, 0
      %v2209 = vsel %vm414, %v2146, 0
      %v2211 = vsel %vm414, %v2148, 0
      %v2213 = vsel %vm414, %v2150, 0
      %v2215 = vsel %vm414, %v2152, 0
      %v2217 = vsel %vm414, %v2154, 0
      %v2219 = vsel %vm414, %v2156, 0
      %v2221 = vsel %vm414, %v2158, 0
      %v2223 = vsel %vm414, %v2160, 0
      %v2225 = vsel %vm414, %v2162, 0
      %v2227 = vsel %vm414, %v2164, 0
      %v2229 = vsel %vm414, %v2166, 0
      %v2231 = vsel %vm414, %v2168, 0
      %v2233 = vsel %vm414, %v2170, 0
      %v2235 = vsel %vm414, %v2172, 0
      %2237 = vmatpush.xpose.msra.mxu0 %v2235
      %2238 = vmatpush.xpose.msra.mxu0 %v2233
      %2239 = vmatpush.xpose.msra.mxu0 %v2231
      %2240 = vmatpush.xpose.msra.mxu0 %v2229
      %2241 = vmatpush.xpose.msra.mxu0 %v2227
      %2242 = vmatpush.xpose.msra.mxu0 %v2225
      %2243 = vmatpush.xpose.msra.mxu0 %v2223
      %2244 = vmatpush.xpose.msra.mxu0 %v2221
      %2245 = vmatpush.xpose.msra.mxu0 %v2219
      %2246 = vmatpush.xpose.msra.mxu0 %v2217
      %2247 = vmatpush.xpose.msra.mxu0 %v2215
      %2248 = vmatpush.xpose.msra.mxu0 %v2213
      %2249 = vmatpush.xpose.msra.mxu0 %v2211
      %2250 = vmatpush.xpose.msra.mxu0 %v2209
      %2251 = vmatpush.xpose.msra.mxu0 %v2207
      %2252 = vmatpush.xpose.msra.mxu0 %v2205
      %2253 = vmatmul.f32.gmra.mxu0 %v2173
      %v2254 = vpop.f32.mrf.mxu0
      %v2255 = vadd.f32 0.0, %v2254
      %2256 = vmatmul.f32.gmra.mxu0 %v2175
      %v2257 = vpop.f32.mrf.mxu0
      %v2258 = vadd.f32 0.0, %v2257
      %2259 = vmatmul.f32.gmra.mxu0 %v2177
      %v2260 = vpop.f32.mrf.mxu0
      %v2261 = vadd.f32 0.0, %v2260
      %2262 = vmatmul.f32.gmra.mxu0 %v2179
      %v2263 = vpop.f32.mrf.mxu0
      %v2264 = vadd.f32 0.0, %v2263
      %2265 = vmatmul.f32.gmra.mxu0 %v2181
      %v2266 = vpop.f32.mrf.mxu0
      %v2267 = vadd.f32 0.0, %v2266
      %2268 = vmatmul.f32.gmra.mxu0 %v2183
      %v2269 = vpop.f32.mrf.mxu0
      %v2270 = vadd.f32 0.0, %v2269
      %2271 = vmatmul.f32.gmra.mxu0 %v2185
      %v2272 = vpop.f32.mrf.mxu0
      %v2273 = vadd.f32 0.0, %v2272
      %2274 = vmatmul.f32.gmra.mxu0 %v2187
      %v2275 = vpop.f32.mrf.mxu0
      %v2276 = vadd.f32 0.0, %v2275
      %2277 = vmatmul.f32.gmra.mxu0 %v2189
      %v2278 = vpop.f32.mrf.mxu0
      %v2279 = vadd.f32 0.0, %v2278
      %2280 = vmatmul.f32.gmra.mxu0 %v2191
      %v2281 = vpop.f32.mrf.mxu0
      %v2282 = vadd.f32 0.0, %v2281
      %2283 = vmatmul.f32.gmra.mxu0 %v2193
      %v2284 = vpop.f32.mrf.mxu0
      %v2285 = vadd.f32 0.0, %v2284
      %2286 = vmatmul.f32.gmra.mxu0 %v2195
      %v2287 = vpop.f32.mrf.mxu0
      %v2288 = vadd.f32 0.0, %v2287
      %2289 = vmatmul.f32.gmra.mxu0 %v2197
      %v2290 = vpop.f32.mrf.mxu0
      %v2291 = vadd.f32 0.0, %v2290
      %2292 = vmatmul.f32.gmra.mxu0 %v2199
      %v2293 = vpop.f32.mrf.mxu0
      %v2294 = vadd.f32 0.0, %v2293
      %2295 = vmatmul.f32.gmra.mxu0 %v2201
      %v2296 = vpop.f32.mrf.mxu0
      %v2297 = vadd.f32 0.0, %v2296
      %2298 = vmatmul.f32.gmra.mxu0 %v2203
      %v2299 = vpop.f32.mrf.mxu0
      %v2300 = vadd.f32 0.0, %v2299
      %2301 = vdwg.mxu0
      %v2302 = vsel %vm545, %v2255, -1e+30
      %v2303 = vsel %vm545, %v2258, -1e+30
      %v2304 = vsel %vm545, %v2261, -1e+30
      %v2305 = vsel %vm545, %v2264, -1e+30
      %v2306 = vsel %vm545, %v2267, -1e+30
      %v2307 = vsel %vm545, %v2270, -1e+30
      %v2308 = vsel %vm545, %v2273, -1e+30
      %v2309 = vsel %vm545, %v2276, -1e+30
      %v2310 = vsel %vm545, %v2279, -1e+30
      %v2311 = vsel %vm545, %v2282, -1e+30
      %v2312 = vsel %vm545, %v2285, -1e+30
      %v2313 = vsel %vm545, %v2288, -1e+30
      %v2314 = vsel %vm545, %v2291, -1e+30
      %v2315 = vsel %vm545, %v2294, -1e+30
      %v2316 = vsel %vm545, %v2297, -1e+30
      %v2317 = vsel %vm545, %v2300, -1e+30
      %2318 = vmax.xlane.f32.xlu0 %v2302
      %v2319 = vpop.xlane.xlu0 %2318
      %2320 = vmax.xlane.f32.xlu0 %v2303
      %v2321 = vpop.xlane.xlu0 %2320
      %2322 = vmax.xlane.f32.xlu0 %v2304
      %v2323 = vpop.xlane.xlu0 %2322
      %2324 = vmax.xlane.f32.xlu0 %v2305
      %v2325 = vpop.xlane.xlu0 %2324
      %2326 = vmax.xlane.f32.xlu0 %v2306
      %v2327 = vpop.xlane.xlu0 %2326
      %2328 = vmax.xlane.f32.xlu0 %v2307
      %v2329 = vpop.xlane.xlu0 %2328
      %2330 = vmax.xlane.f32.xlu0 %v2308
      %v2331 = vpop.xlane.xlu0 %2330
      %2332 = vmax.xlane.f32.xlu0 %v2309
      %v2333 = vpop.xlane.xlu0 %2332
      %2334 = vmax.xlane.f32.xlu0 %v2310
      %v2335 = vpop.xlane.xlu0 %2334
      %2336 = vmax.xlane.f32.xlu0 %v2311
      %v2337 = vpop.xlane.xlu0 %2336
      %2338 = vmax.xlane.f32.xlu0 %v2312
      %v2339 = vpop.xlane.xlu0 %2338
      %2340 = vmax.xlane.f32.xlu0 %v2313
      %v2341 = vpop.xlane.xlu0 %2340
      %2342 = vmax.xlane.f32.xlu0 %v2314
      %v2343 = vpop.xlane.xlu0 %2342
      %2344 = vmax.xlane.f32.xlu0 %v2315
      %v2345 = vpop.xlane.xlu0 %2344
      %2346 = vmax.xlane.f32.xlu0 %v2316
      %v2347 = vpop.xlane.xlu0 %2346
      %2348 = vmax.xlane.f32.xlu0 %v2317
      %v2349 = vpop.xlane.xlu0 %2348
      %v2350 = vsub.f32 %v2302, %v2319
      %v2351 = vsub.f32 %v2303, %v2321
      %v2352 = vsub.f32 %v2304, %v2323
      %v2353 = vsub.f32 %v2305, %v2325
      %v2354 = vsub.f32 %v2306, %v2327
      %v2355 = vsub.f32 %v2307, %v2329
      %v2356 = vsub.f32 %v2308, %v2331
      %v2357 = vsub.f32 %v2309, %v2333
      %v2358 = vsub.f32 %v2310, %v2335
      %v2359 = vsub.f32 %v2311, %v2337
      %v2360 = vsub.f32 %v2312, %v2339
      %v2361 = vsub.f32 %v2313, %v2341
      %v2362 = vsub.f32 %v2314, %v2343
      %v2363 = vsub.f32 %v2315, %v2345
      %v2364 = vsub.f32 %v2316, %v2347
      %v2365 = vsub.f32 %v2317, %v2349
      %v2366 = vmul.f32 %v2350, 1.442695
      %v2367 = vpow.pop %v2366
      %v2368 = vmul.f32 %v2351, 1.442695
      %v2369 = vpow.pop %v2368
      %v2370 = vmul.f32 %v2352, 1.442695
      %v2371 = vpow.pop %v2370
      %v2372 = vmul.f32 %v2353, 1.442695
      %v2373 = vpow.pop %v2372
      %v2374 = vmul.f32 %v2354, 1.442695
      %v2375 = vpow.pop %v2374
      %v2376 = vmul.f32 %v2355, 1.442695
      %v2377 = vpow.pop %v2376
      %v2378 = vmul.f32 %v2356, 1.442695
      %v2379 = vpow.pop %v2378
      %v2380 = vmul.f32 %v2357, 1.442695
      %v2381 = vpow.pop %v2380
      %v2382 = vmul.f32 %v2358, 1.442695
      %v2383 = vpow.pop %v2382
      %v2384 = vmul.f32 %v2359, 1.442695
      %v2385 = vpow.pop %v2384
      %v2386 = vmul.f32 %v2360, 1.442695
      %v2387 = vpow.pop %v2386
      %v2388 = vmul.f32 %v2361, 1.442695
      %v2389 = vpow.pop %v2388
      %v2390 = vmul.f32 %v2362, 1.442695
      %v2391 = vpow.pop %v2390
      %v2392 = vmul.f32 %v2363, 1.442695
      %v2393 = vpow.pop %v2392
      %v2394 = vmul.f32 %v2364, 1.442695
      %v2395 = vpow.pop %v2394
      %v2396 = vmul.f32 %v2365, 1.442695
      %v2397 = vpow.pop %v2396
      %2398 = vadd.xlane.f32.xlu0 %v2367
      %v2399 = vpop.xlane.xlu0 %2398
      %2400 = vadd.xlane.f32.xlu0 %v2369
      %v2401 = vpop.xlane.xlu0 %2400
      %2402 = vadd.xlane.f32.xlu0 %v2371
      %v2403 = vpop.xlane.xlu0 %2402
      %2404 = vadd.xlane.f32.xlu0 %v2373
      %v2405 = vpop.xlane.xlu0 %2404
      %2406 = vadd.xlane.f32.xlu0 %v2375
      %v2407 = vpop.xlane.xlu0 %2406
      %2408 = vadd.xlane.f32.xlu0 %v2377
      %v2409 = vpop.xlane.xlu0 %2408
      %2410 = vadd.xlane.f32.xlu0 %v2379
      %v2411 = vpop.xlane.xlu0 %2410
      %2412 = vadd.xlane.f32.xlu0 %v2381
      %v2413 = vpop.xlane.xlu0 %2412
      %2414 = vadd.xlane.f32.xlu0 %v2383
      %v2415 = vpop.xlane.xlu0 %2414
      %2416 = vadd.xlane.f32.xlu0 %v2385
      %v2417 = vpop.xlane.xlu0 %2416
      %2418 = vadd.xlane.f32.xlu0 %v2387
      %v2419 = vpop.xlane.xlu0 %2418
      %2420 = vadd.xlane.f32.xlu0 %v2389
      %v2421 = vpop.xlane.xlu0 %2420
      %2422 = vadd.xlane.f32.xlu0 %v2391
      %v2423 = vpop.xlane.xlu0 %2422
      %2424 = vadd.xlane.f32.xlu0 %v2393
      %v2425 = vpop.xlane.xlu0 %2424
      %2426 = vadd.xlane.f32.xlu0 %v2395
      %v2427 = vpop.xlane.xlu0 %2426
      %2428 = vadd.xlane.f32.xlu0 %v2397
      %v2429 = vpop.xlane.xlu0 %2428
      %v2430 = vrcp.pop %v2399
      %v2431 = vrcp.pop %v2401
      %v2432 = vrcp.pop %v2403
      %v2433 = vrcp.pop %v2405
      %v2434 = vrcp.pop %v2407
      %v2435 = vrcp.pop %v2409
      %v2436 = vrcp.pop %v2411
      %v2437 = vrcp.pop %v2413
      %v2438 = vrcp.pop %v2415
      %v2439 = vrcp.pop %v2417
      %v2440 = vrcp.pop %v2419
      %v2441 = vrcp.pop %v2421
      %v2442 = vrcp.pop %v2423
      %v2443 = vrcp.pop %v2425
      %v2444 = vrcp.pop %v2427
      %v2445 = vrcp.pop %v2429
      %v2446 = vmul.f32 %v2367, %v2430
      %v2447 = vmul.f32 %v2369, %v2431
      %v2448 = vmul.f32 %v2371, %v2432
      %v2449 = vmul.f32 %v2373, %v2433
      %v2450 = vmul.f32 %v2375, %v2434
      %v2451 = vmul.f32 %v2377, %v2435
      %v2452 = vmul.f32 %v2379, %v2436
      %v2453 = vmul.f32 %v2381, %v2437
      %v2454 = vmul.f32 %v2383, %v2438
      %v2455 = vmul.f32 %v2385, %v2439
      %v2456 = vmul.f32 %v2387, %v2440
      %v2457 = vmul.f32 %v2389, %v2441
      %v2458 = vmul.f32 %v2391, %v2442
      %v2459 = vmul.f32 %v2393, %v2443
      %v2460 = vmul.f32 %v2395, %v2444
      %v2461 = vmul.f32 %v2397, %v2445
      %2462 = vrot.lane.b32.xlu0 %v316, 40
      %v2463 = vpop.permute.xlu0 %2462
      %2464 = vrot.lane.b32.xlu0 %v319, 40
      %v2465 = vpop.permute.xlu0 %2464
      %2466 = vrot.lane.b32.xlu0 %v322, 40
      %v2467 = vpop.permute.xlu0 %2466
      %2468 = vrot.lane.b32.xlu0 %v325, 40
      %v2469 = vpop.permute.xlu0 %2468
      %2470 = vrot.lane.b32.xlu0 %v328, 40
      %v2471 = vpop.permute.xlu0 %2470
      %2472 = vrot.lane.b32.xlu0 %v331, 40
      %v2473 = vpop.permute.xlu0 %2472
      %2474 = vrot.lane.b32.xlu0 %v334, 40
      %v2475 = vpop.permute.xlu0 %2474
      %2476 = vrot.lane.b32.xlu0 %v337, 40
      %v2477 = vpop.permute.xlu0 %2476
      %2478 = vrot.lane.b32.xlu0 %v340, 40
      %v2479 = vpop.permute.xlu0 %2478
      %2480 = vrot.lane.b32.xlu0 %v343, 40
      %v2481 = vpop.permute.xlu0 %2480
      %2482 = vrot.lane.b32.xlu0 %v346, 40
      %v2483 = vpop.permute.xlu0 %2482
      %2484 = vrot.lane.b32.xlu0 %v349, 40
      %v2485 = vpop.permute.xlu0 %2484
      %2486 = vrot.lane.b32.xlu0 %v352, 40
      %v2487 = vpop.permute.xlu0 %2486
      %2488 = vrot.lane.b32.xlu0 %v355, 40
      %v2489 = vpop.permute.xlu0 %2488
      %2490 = vrot.lane.b32.xlu0 %v358, 40
      %v2491 = vpop.permute.xlu0 %2490
      %2492 = vrot.lane.b32.xlu0 %v361, 40
      %v2493 = vpop.permute.xlu0 %2492
      %2510 = vmatpush.msra.mxu0 %v2493
      %2511 = vmatpush.msra.mxu0 %v2491
      %2512 = vmatpush.msra.mxu0 %v2489
      %2513 = vmatpush.msra.mxu0 %v2487
      %2514 = vmatpush.msra.mxu0 %v2485
      %2515 = vmatpush.msra.mxu0 %v2483
      %2516 = vmatpush.msra.mxu0 %v2481
      %2517 = vmatpush.msra.mxu0 %v2479
      %2518 = vmatpush.msra.mxu0 %v2477
      %2519 = vmatpush.msra.mxu0 %v2475
      %2520 = vmatpush.msra.mxu0 %v2473
      %2521 = vmatpush.msra.mxu0 %v2471
      %2522 = vmatpush.msra.mxu0 %v2469
      %2523 = vmatpush.msra.mxu0 %v2467
      %2524 = vmatpush.msra.mxu0 %v2465
      %2525 = vmatpush.msra.mxu0 %v2463
      %2526 = vmatmul.f32.gmra.mxu0 %v2446
      %v2527 = vpop.f32.mrf.mxu0
      %v2528 = vadd.f32 0.0, %v2527
      %2529 = vmatmul.f32.gmra.mxu0 %v2447
      %v2530 = vpop.f32.mrf.mxu0
      %v2531 = vadd.f32 0.0, %v2530
      %2532 = vmatmul.f32.gmra.mxu0 %v2448
      %v2533 = vpop.f32.mrf.mxu0
      %v2534 = vadd.f32 0.0, %v2533
      %2535 = vmatmul.f32.gmra.mxu0 %v2449
      %v2536 = vpop.f32.mrf.mxu0
      %v2537 = vadd.f32 0.0, %v2536
      %2538 = vmatmul.f32.gmra.mxu0 %v2450
      %v2539 = vpop.f32.mrf.mxu0
      %v2540 = vadd.f32 0.0, %v2539
      %2541 = vmatmul.f32.gmra.mxu0 %v2451
      %v2542 = vpop.f32.mrf.mxu0
      %v2543 = vadd.f32 0.0, %v2542
      %2544 = vmatmul.f32.gmra.mxu0 %v2452
      %v2545 = vpop.f32.mrf.mxu0
      %v2546 = vadd.f32 0.0, %v2545
      %2547 = vmatmul.f32.gmra.mxu0 %v2453
      %v2548 = vpop.f32.mrf.mxu0
      %v2549 = vadd.f32 0.0, %v2548
      %2550 = vmatmul.f32.gmra.mxu0 %v2454
      %v2551 = vpop.f32.mrf.mxu0
      %v2552 = vadd.f32 0.0, %v2551
      %2553 = vmatmul.f32.gmra.mxu0 %v2455
      %v2554 = vpop.f32.mrf.mxu0
      %v2555 = vadd.f32 0.0, %v2554
      %2556 = vmatmul.f32.gmra.mxu0 %v2456
      %v2557 = vpop.f32.mrf.mxu0
      %v2558 = vadd.f32 0.0, %v2557
      %2559 = vmatmul.f32.gmra.mxu0 %v2457
      %v2560 = vpop.f32.mrf.mxu0
      %v2561 = vadd.f32 0.0, %v2560
      %2562 = vmatmul.f32.gmra.mxu0 %v2458
      %v2563 = vpop.f32.mrf.mxu0
      %v2564 = vadd.f32 0.0, %v2563
      %2565 = vmatmul.f32.gmra.mxu0 %v2459
      %v2566 = vpop.f32.mrf.mxu0
      %v2567 = vadd.f32 0.0, %v2566
      %2568 = vmatmul.f32.gmra.mxu0 %v2460
      %v2569 = vpop.f32.mrf.mxu0
      %v2570 = vadd.f32 0.0, %v2569
      %2571 = vmatmul.f32.gmra.mxu0 %v2461
      %v2572 = vpop.f32.mrf.mxu0
      %v2573 = vadd.f32 0.0, %v2572
      %2574 = vdwg.mxu0
      %v2575 = vld [vmem:[%s3 + $0x18] sm:$0xff]
      %v2577 = vsel %vm414, %v2528, 0
      %v2580 = vsel %vm414, %v2531, 0
      %v2583 = vsel %vm414, %v2534, 0
      %v2586 = vsel %vm414, %v2537, 0
      %v2589 = vsel %vm414, %v2540, 0
      %v2592 = vsel %vm414, %v2543, 0
      %v2595 = vsel %vm414, %v2546, 0
      %v2598 = vsel %vm414, %v2549, 0
      %v2601 = vsel %vm414, %v2552, 0
      %v2604 = vsel %vm414, %v2555, 0
      %v2607 = vsel %vm414, %v2558, 0
      %v2610 = vsel %vm414, %v2561, 0
      %v2613 = vsel %vm414, %v2564, 0
      %v2616 = vsel %vm414, %v2567, 0
      %v2619 = vsel %vm414, %v2570, 0
      %v2622 = vsel %vm414, %v2573, 0
      %2624 = vmatpush.msra.mxu0 0.0
      %2625 = vmatpush.msra.mxu0 0.0
      %2626 = vmatpush.msra.mxu0 0.0
      %2627 = vmatpush.msra.mxu0 0.0
      %2628 = vmatpush.msra.mxu0 0.0
      %2629 = vmatpush.msra.mxu0 0.0
      %2630 = vmatpush.msra.mxu0 0.0
      %2631 = vmatpush.msra.mxu0 0.0
      %2632 = vmatpush.msra.mxu0 0.0
      %2633 = vmatpush.msra.mxu0 0.0
      %2634 = vmatpush.msra.mxu0 0.0
      %2635 = vmatpush.msra.mxu0 0.0
      %2636 = vmatpush.msra.mxu0 0.0
      %2637 = vmatpush.msra.mxu0 0.0
      %2638 = vmatpush.msra.mxu0 0.0
      %2639 = vmatpush.msra.mxu0 %v2575
      %2640 = vmatmul.f32.gmra.mxu0 %v2577
      %v2641 = vpop.f32.mrf.mxu0
      %v2642 = vadd.f32 0.0, %v2641
      %2643 = vmatmul.f32.gmra.mxu0 %v2580
      %v2644 = vpop.f32.mrf.mxu0
      %v2645 = vadd.f32 0.0, %v2644
      %2646 = vmatmul.f32.gmra.mxu0 %v2583
      %v2647 = vpop.f32.mrf.mxu0
      %v2648 = vadd.f32 0.0, %v2647
      %2649 = vmatmul.f32.gmra.mxu0 %v2586
      %v2650 = vpop.f32.mrf.mxu0
      %v2651 = vadd.f32 0.0, %v2650
      %2652 = vmatmul.f32.gmra.mxu0 %v2589
      %v2653 = vpop.f32.mrf.mxu0
      %v2654 = vadd.f32 0.0, %v2653
      %2655 = vmatmul.f32.gmra.mxu0 %v2592
      %v2656 = vpop.f32.mrf.mxu0
      %v2657 = vadd.f32 0.0, %v2656
      %2658 = vmatmul.f32.gmra.mxu0 %v2595
      %v2659 = vpop.f32.mrf.mxu0
      %v2660 = vadd.f32 0.0, %v2659
      %2661 = vmatmul.f32.gmra.mxu0 %v2598
      %v2662 = vpop.f32.mrf.mxu0
      %v2663 = vadd.f32 0.0, %v2662
      %2664 = vmatmul.f32.gmra.mxu0 %v2601
      %v2665 = vpop.f32.mrf.mxu0
      %v2666 = vadd.f32 0.0, %v2665
      %2667 = vmatmul.f32.gmra.mxu0 %v2604
      %v2668 = vpop.f32.mrf.mxu0
      %v2669 = vadd.f32 0.0, %v2668
      %2670 = vmatmul.f32.gmra.mxu0 %v2607
      %v2671 = vpop.f32.mrf.mxu0
      %v2672 = vadd.f32 0.0, %v2671
      %2673 = vmatmul.f32.gmra.mxu0 %v2610
      %v2674 = vpop.f32.mrf.mxu0
      %v2675 = vadd.f32 0.0, %v2674
      %2676 = vmatmul.f32.gmra.mxu0 %v2613
      %v2677 = vpop.f32.mrf.mxu0
      %v2678 = vadd.f32 0.0, %v2677
      %2679 = vmatmul.f32.gmra.mxu0 %v2616
      %v2680 = vpop.f32.mrf.mxu0
      %v2681 = vadd.f32 0.0, %v2680
      %2682 = vmatmul.f32.gmra.mxu0 %v2619
      %v2683 = vpop.f32.mrf.mxu0
      %v2684 = vadd.f32 0.0, %v2683
      %2685 = vmatmul.f32.gmra.mxu0 %v2622
      %v2686 = vpop.f32.mrf.mxu0
      %v2687 = vadd.f32 0.0, %v2686
      %2688 = vdwg.mxu0
      %v2689 = vadd.f32 %v2093, %v2642
      %v2690 = vadd.f32 %v2094, %v2645
      %v2691 = vadd.f32 %v2095, %v2648
      %v2692 = vadd.f32 %v2096, %v2651
      %v2693 = vadd.f32 %v2097, %v2654
      %v2694 = vadd.f32 %v2098, %v2657
      %v2695 = vadd.f32 %v2099, %v2660
      %v2696 = vadd.f32 %v2100, %v2663
      %v2697 = vadd.f32 %v2101, %v2666
      %v2698 = vadd.f32 %v2102, %v2669
      %v2699 = vadd.f32 %v2103, %v2672
      %v2700 = vadd.f32 %v2104, %v2675
      %v2701 = vadd.f32 %v2105, %v2678
      %v2702 = vadd.f32 %v2106, %v2681
      %v2703 = vadd.f32 %v2107, %v2684
      %v2704 = vadd.f32 %v2108, %v2687
      %v2705 = vld [vmem:[%s4] sm:$0x1]
      %v2707 = vperm.slane %v2705, 0
      %v2709 = vadd.f32 %v2689, %v2707
      %v2710 = vadd.f32 %v2690, %v2707
      %v2711 = vadd.f32 %v2691, %v2707
      %v2712 = vadd.f32 %v2692, %v2707
      %v2713 = vadd.f32 %v2693, %v2707
      %v2714 = vadd.f32 %v2694, %v2707
      %v2715 = vadd.f32 %v2695, %v2707
      %v2716 = vadd.f32 %v2696, %v2707
      %v2717 = vadd.f32 %v2697, %v2707
      %v2718 = vadd.f32 %v2698, %v2707
      %v2719 = vadd.f32 %v2699, %v2707
      %v2720 = vadd.f32 %v2700, %v2707
      %v2721 = vadd.f32 %v2701, %v2707
      %v2722 = vadd.f32 %v2702, %v2707
      %v2723 = vadd.f32 %v2703, %v2707
      %v2724 = vadd.f32 %v2704, %v2707
      %2725 = vst.msk [vmem:[%s224] sm:$0xff] %vm249, %v2709
      %2726 = vst.msk [vmem:[%s224 + $0x8] sm:$0xff] %vm249, %v2710
      %2727 = vst.msk [vmem:[%s224 + $0x10] sm:$0xff] %vm249, %v2711
      %2728 = vst.msk [vmem:[%s224 + $0x18] sm:$0xff] %vm249, %v2712
      %2729 = vst.msk [vmem:[%s224 + $0x20] sm:$0xff] %vm249, %v2713
      %2730 = vst.msk [vmem:[%s224 + $0x28] sm:$0xff] %vm249, %v2714
      %2731 = vst.msk [vmem:[%s224 + $0x30] sm:$0xff] %vm249, %v2715
      %2732 = vst.msk [vmem:[%s224 + $0x38] sm:$0xff] %vm249, %v2716
      %2733 = vst.msk [vmem:[%s224 + $0x40] sm:$0xff] %vm249, %v2717
      %2734 = vst.msk [vmem:[%s224 + $0x48] sm:$0xff] %vm249, %v2718
      %2735 = vst.msk [vmem:[%s224 + $0x50] sm:$0xff] %vm249, %v2719
      %2736 = vst.msk [vmem:[%s224 + $0x58] sm:$0xff] %vm249, %v2720
      %2737 = vst.msk [vmem:[%s224 + $0x60] sm:$0xff] %vm249, %v2721
      %2738 = vst.msk [vmem:[%s224 + $0x68] sm:$0xff] %vm249, %v2722
      %2739 = vst.msk [vmem:[%s224 + $0x70] sm:$0xff] %vm249, %v2723
      %2740 = vst.msk [vmem:[%s224 + $0x78] sm:$0xff] %vm249, %v2724
      %p2741 = scmp.lt.s32.totalorder %s16, 1
      %s2742 = scalar_select %p2741, %s16, 1
      %s2743 = smul.addr %s2742, 16
      %s2744 = smul.addr %s2743, 8
      %s2745 = scalar_lea.vmem %s5, %s2744
      // Predicated region
      $region41: #{tpu_custom_call.1} parent=39 // pred_check
        %p2746 = pneg %p144
      $region42: #{tpu_custom_call.1} parent=39 // pred_check_branch
        %2748 = sbr.rel (%p2746) target = $region44
      $region43: #{tpu_custom_call.1} parent=39 // pred_region
        _
      $region44: #{tpu_custom_call.1} parent=39 // pred_fallthru
        _
    $region40: #{tpu_custom_call.1} parent=5 // pred_fallthru
      _
    %p2749 = scmp.le.s32.totalorder 2, %s11
    // Predicated region
    $region45: #{tpu_custom_call.1} parent=5 // pred_check
      %p2750 = pneg %p2749
    $region46: #{tpu_custom_call.1} parent=5 // pred_check_branch
      %2752 = sbr.rel (%p2750) target = $region48
    $region47: #{tpu_custom_call.1} parent=5 // pred_region
      %s2753 = ssub.s32 %s11, 2
      // Predicated region
      $region49: #{tpu_custom_call.1} parent=47 // pred_check
        %p2754 = pneg %p150
      $region50: #{tpu_custom_call.1} parent=47 // pred_check_branch
        %2756 = sbr.rel (%p2754) target = $region52
      $region51: #{tpu_custom_call.1} parent=47 // pred_region
        %p2757 = scmp.lt.s32.totalorder %s17, 1
        %s2758 = scalar_select %p2757, %s17, 1
        %s2759 = smul.addr %s2758, 16
        %s2760 = smul.addr %s2759, 8
        %s2761 = scalar_lea.vmem %s5, %s2760
      $region52: #{tpu_custom_call.1} parent=47 // pred_fallthru
        _
    $region48: #{tpu_custom_call.1} parent=5 // pred_fallthru
      _
  $region6: #{tpu_custom_call.1} parent=0 // loop_footer
    %s15 = sadd.s32 1, %s11
  $region7: #{tpu_custom_call.1} parent=0 // loop_footer_branch
    %10 = sbr.rel target = $region3
  $region8: #{tpu_custom_call.1} parent=0 // loop_exit
    _

</llo_original>
